<compile_context>
chip_gen: v7x
topology: tpu7x:2x2x1
jax: 0.10.0
libtpu: 0.0.40
codegen_flags: <defaults>
</compile_context>

<pallas_src>
import math

import jax
import jax.numpy as jnp
from jax import lax
from jax.experimental import pallas as pl
from jax.experimental.pallas import tpu as pltpu

EPS = 1e-5
LEAKY_SLOPE = 0.1


# ----------------------------------------------------------------- kernel ---
def _make_resx_kernel(block_num, c_out, m_lanes, wp, cdt):
    """Kernel over one batch element. Activation layout: (channels, Mr)."""

    def kernel(p0_ref, w0_ref, b0_ref, w1_ref, b1_ref, w2_ref, b2_ref,
               mask_ref, o_ref):
        mask = mask_ref[...]                       # (1, Mr)  1=real pixel

        def cbl_epilogue(z, bias):                 # bias + LeakyReLU + re-zero pad
            y = z + bias                           # bias: (C, 1), lane-broadcast
            y = jnp.where(y > 0, y, LEAKY_SLOPE * y)
            return y * mask

        # --- layer 0: stride-2 3x3 conv as one matmul over prebuilt taps -----
        a = cbl_epilogue(
            jnp.dot(w0_ref[...], p0_ref[0],
                    preferred_element_type=jnp.float32),
            b0_ref[...])                           # (Cout, Mr) fp32

        # --- residual units (static unroll; weights stay resident) ----------
        for blk in range(block_num):
            # 1x1 CBL: Cout -> Cin
            y = cbl_epilogue(
                jnp.dot(w1_ref[blk], a.astype(cdt),
                        preferred_element_type=jnp.float32),
                b1_ref[blk])                       # (Cin, Mr) fp32

            # 3x3 CBL (pad 1) as shift-and-add over the padded flat layout
            z = jnp.zeros((c_out, m_lanes), jnp.float32)
            for t in range(9):
                dy, dx = t // 3, t % 3
                off = (dy - 1) * wp + (dx - 1)     # flat padded-coord offset
                yt = y if off == 0 else pltpu.roll(y, (-off) % m_lanes, axis=1)
                z = z + jnp.dot(w2_ref[blk, t], yt.astype(cdt),
                                preferred_element_type=jnp.float32)
            a = a + cbl_epilogue(z, b2_ref[blk])   # residual add

        o_ref[...] = a.reshape(1, c_out, m_lanes).astype(o_ref.dtype)

    return kernel


# ---------------------------------------------------------------- wrapper ---
def _fold_bn(w, b, gamma, beta, mean, var):
    """Fold eval-mode BN into conv weight/bias (y = (w*scale).x + bias)."""
    scale = gamma / jnp.sqrt(var + EPS)
    return w * scale[:, None, None, None], beta + scale * (b - mean)


def resx_forward(x_nchw, params, compute_dtype=jnp.float32):
    """ResX forward. x_nchw: (N, Cin, H0, W0) -> (N, Cout, H, W) (NCHW)."""
    N, Cin, H0, W0 = x_nchw.shape
    p0, blocks = params["cbl0"], params["blocks"]
    B = len(blocks)
    assert B >= 1, "block_num must be >= 1"
    Cout = p0["w"].shape[0]

    # output spatial of the stride-2, pad-1, k=3 conv
    H = (H0 - 1) // 2 + 1
    W = (W0 - 1) // 2 + 1
    Hp, Wp = H + 2, W + 2                          # +1 zero border for the 3x3s
    M = Hp * Wp
    Mr = ((M + 127) // 128) * 128                  # lane-pad flat spatial axis

    # --- layer-0 (stride 2) 9-tap gather, placed on the padded flat grid -----
    xpad = jnp.pad(x_nchw, ((0, 0), (0, 0), (1, 1), (1, 1)))
    taps = [xpad[:, :, dy:dy + 2 * H:2, dx:dx + 2 * W:2]
            for dy in range(3) for dx in range(3)]          # each (N,Cin,H,W)
    patches = jnp.concatenate(taps, axis=1)                  # (N, 9*Cin, H, W)
    pp = jnp.zeros((N, 9 * Cin, Hp, Wp), jnp.float32)
    pp = pp.at[:, :, 1:H + 1, 1:W + 1].set(patches)
    pp = pp.reshape(N, 9 * Cin, M)
    pp = jnp.pad(pp, ((0, 0), (0, 0), (0, Mr - M))).astype(compute_dtype)

    # --- fold BN, pack weights -----------------------------------------------
    w0f, b0f = _fold_bn(p0["w"], p0["b"], p0["gamma"], p0["beta"],
                        p0["mean"], p0["var"])
    w0m = w0f.transpose(0, 2, 3, 1).reshape(Cout, 9 * Cin).astype(compute_dtype)
    b0v = b0f.reshape(Cout, 1)

    w1_l, b1_l, w2_l, b2_l = [], [], [], []
    for blk in blocks:
        w1f, b1f = _fold_bn(blk["cbl1"]["w"], blk["cbl1"]["b"],
                            blk["cbl1"]["gamma"], blk["cbl1"]["beta"],
                            blk["cbl1"]["mean"], blk["cbl1"]["var"])
        w2f, b2f = _fold_bn(blk["cbl2"]["w"], blk["cbl2"]["b"],
                            blk["cbl2"]["gamma"], blk["cbl2"]["beta"],
                            blk["cbl2"]["mean"], blk["cbl2"]["var"])
        w1_l.append(w1f[:, :, 0, 0])                         # (Cin, Cout)
        b1_l.append(b1f.reshape(Cin, 1))
        w2_l.append(w2f.transpose(2, 3, 0, 1).reshape(9, Cout, Cin))
        b2_l.append(b2f.reshape(Cout, 1))
    w1m = jnp.stack(w1_l).astype(compute_dtype)              # (B, Cin, Cout)
    b1m = jnp.stack(b1_l)                                    # (B, Cin, 1)
    w2m = jnp.stack(w2_l).astype(compute_dtype)              # (B, 9, Cout, Cin)
    b2m = jnp.stack(b2_l)                                    # (B, Cout, 1)

    # interior mask over the padded flat spatial axis
    pidx = jnp.arange(Mr)
    ii, jj = pidx // Wp, pidx % Wp
    mask = ((pidx < M) & (ii >= 1) & (ii <= H) & (jj >= 1) & (jj <= W))
    mask = mask.astype(jnp.float32).reshape(1, Mr)

    kernel = _make_resx_kernel(B, Cout, Mr, Wp, compute_dtype)

    out_flat = pl.pallas_call(
        kernel,
        out_shape=jax.ShapeDtypeStruct((N, Cout, Mr), jnp.float32),
        grid=(N,),
        in_specs=[
            pl.BlockSpec((1, 9 * Cin, Mr), lambda n: (n, 0, 0)),
            pl.BlockSpec((Cout, 9 * Cin), lambda n: (0, 0)),
            pl.BlockSpec((Cout, 1), lambda n: (0, 0)),
            pl.BlockSpec((B, Cin, Cout), lambda n: (0, 0, 0)),
            pl.BlockSpec((B, Cin, 1), lambda n: (0, 0, 0)),
            pl.BlockSpec((B, 9, Cout, Cin), lambda n: (0, 0, 0, 0)),
            pl.BlockSpec((B, Cout, 1), lambda n: (0, 0, 0)),
            pl.BlockSpec((1, Mr), lambda n: (0, 0)),
        ],
        out_specs=pl.BlockSpec((1, Cout, Mr), lambda n: (n, 0, 0)),
        compiler_params=pltpu.CompilerParams(
            dimension_semantics=("parallel",)),
    )(pp, w0m, b0v, w1m, b1m, w2m, b2m, mask)

    # strip lane padding + zero border -> NCHW output
    out = out_flat[:, :, :M].reshape(N, Cout, Hp, Wp)[:, :, 1:H + 1, 1:W + 1]
    return out


# ------------------------------------------------------------------ params ---
def _init_cbl(key, cin, cout, k):
    kw, kb, kg, kbe, km, kv = jax.random.split(key, 6)
    bound = 1.0 / math.sqrt(cin * k * k)
    return dict(
        w=jax.random.uniform(kw, (cout, cin, k, k), jnp.float32, -bound, bound),
        b=jax.random.uniform(kb, (cout,), jnp.float32, -bound, bound),
        gamma=jax.random.uniform(kg, (cout,), jnp.float32, 0.5, 1.5),
        beta=jax.random.normal(kbe, (cout,), jnp.float32) * 0.1,
        mean=jax.random.normal(km, (cout,), jnp.float32) * 0.1,
        var=jax.random.uniform(kv, (cout,), jnp.float32, 0.5, 1.5),
    )


def build_resx_params(key, in_num, out_num, block_num):
    keys = jax.random.split(key, 2 * block_num + 1)
    params = {"cbl0": _init_cbl(keys[0], in_num, out_num, 3), "blocks": []}
    for i in range(block_num):
        params["blocks"].append({
            "cbl1": _init_cbl(keys[2 * i + 1], out_num, in_num, 1),
            "cbl2": _init_cbl(keys[2 * i + 2], in_num, out_num, 3),
        })
    return params


# --------------------------------------------------------------- reference ---
def _ref_cbl(x, p, stride, pad):
    y = lax.conv_general_dilated(
        x, p["w"], (stride, stride), [(pad, pad), (pad, pad)],
        dimension_numbers=("NCHW", "OIHW", "NCHW"))
    y = y + p["b"][None, :, None, None]
    y = (y - p["mean"][None, :, None, None]) \
        * (p["gamma"] / jnp.sqrt(p["var"] + EPS))[None, :, None, None] \
        + p["beta"][None, :, None, None]
    return jnp.where(y > 0, y, LEAKY_SLOPE * y)


def ref_resx(x, params):
    x = _ref_cbl(x, params["cbl0"], 2, 1)
    for blk in params["blocks"]:
        r = x
        x = _ref_cbl(x, blk["cbl1"], 1, 0)
        x = _ref_cbl(x, blk["cbl2"], 1, 1)
        x = x + r
    return x


# -------------------------------------------------------------------- main ---
if __name__ == "__main__":
    key = jax.random.PRNGKey(0)
    k_x, k_p = jax.random.split(key)

    N, IN_NUM, OUT_NUM, BLOCK_NUM, H0, W0 = 2, 4, 8, 2, 16, 16
    x = jax.random.normal(k_x, (N, IN_NUM, H0, W0), jnp.float32)
    params = build_resx_params(k_p, IN_NUM, OUT_NUM, BLOCK_NUM)

    ref = jax.block_until_ready(ref_resx(x, params))
    assert ref.shape == (N, OUT_NUM, H0 // 2, W0 // 2), ref.shape

    # fp32 operands (exact check vs XLA conv reference)
    out = jax.block_until_ready(resx_forward(x, params, jnp.float32))
    assert out.shape == ref.shape, out.shape
    err = float(jnp.max(jnp.abs(out - ref)))
    assert jnp.allclose(out, ref, atol=1e-4, rtol=1e-4), err

    # bf16 operands / fp32 accumulation (MXU-friendly path for v6e/v7x)
    out_bf = jax.block_until_ready(resx_forward(x, params, jnp.bfloat16))
    err_bf = float(jnp.max(jnp.abs(out_bf - ref)))
    assert err_bf < 0.2, err_bf

    print("KERNEL_OK")
</pallas_src>

<mosaic_0001>
module attributes {stable_mosaic.version = 11 : i64} {
  func.func @kernel(%arg0: i32, %arg1: memref<1x36x128xf32, #tpu.memory_space<vmem>>, %arg2: memref<8x36xf32, #tpu.memory_space<vmem>>, %arg3: memref<8x1xf32, #tpu.memory_space<vmem>>, %arg4: memref<2x4x8xf32, #tpu.memory_space<vmem>>, %arg5: memref<2x4x1xf32, #tpu.memory_space<vmem>>, %arg6: memref<2x9x8x4xf32, #tpu.memory_space<vmem>>, %arg7: memref<2x8x1xf32, #tpu.memory_space<vmem>>, %arg8: memref<1x128xf32, #tpu.memory_space<vmem>>, %arg9: memref<1x8x128xf32, #tpu.memory_space<vmem>>) attributes {dimension_semantics = [#tpu.dimension_semantics<parallel>], iteration_bounds = array<i64: 2>, scalar_prefetch = 0 : i64, scratch_operands = 0 : i64, tpu.core_type = #tpu.core_type<tc>, window_params = [{transform_indices = @transform_0, window_bounds = array<i64: 1, 36, 128>}, {pipeline_mode = #tpu.pipeline_mode<synchronous>, transform_indices = @transform_1, window_bounds = array<i64: 8, 36>}, {pipeline_mode = #tpu.pipeline_mode<synchronous>, transform_indices = @transform_2, window_bounds = array<i64: 8, 1>}, {pipeline_mode = #tpu.pipeline_mode<synchronous>, transform_indices = @transform_3, window_bounds = array<i64: 2, 4, 8>}, {pipeline_mode = #tpu.pipeline_mode<synchronous>, transform_indices = @transform_4, window_bounds = array<i64: 2, 4, 1>}, {pipeline_mode = #tpu.pipeline_mode<synchronous>, transform_indices = @transform_5, window_bounds = array<i64: 2, 9, 8, 4>}, {pipeline_mode = #tpu.pipeline_mode<synchronous>, transform_indices = @transform_6, window_bounds = array<i64: 2, 8, 1>}, {pipeline_mode = #tpu.pipeline_mode<synchronous>, transform_indices = @transform_7, window_bounds = array<i64: 1, 128>}, {transform_indices = @transform_8, window_bounds = array<i64: 1, 8, 128>}]} {
    %c0 = arith.constant 0 : index
    %c0_0 = arith.constant 0 : index
    %0 = vector.load %arg8[%c0, %c0_0] : memref<1x128xf32, #tpu.memory_space<vmem>>, vector<1x128xf32>
    %c0_1 = arith.constant 0 : index
    %c0_2 = arith.constant 0 : index
    %1 = vector.load %arg2[%c0_1, %c0_2] : memref<8x36xf32, #tpu.memory_space<vmem>>, vector<8x36xf32>
    %c0_3 = arith.constant 0 : index
    %c0_4 = arith.constant 0 : index
    %c0_5 = arith.constant 0 : index
    %2 = vector.load %arg1[%c0_3, %c0_4, %c0_5] : memref<1x36x128xf32, #tpu.memory_space<vmem>>, vector<1x36x128xf32>
    %3 = vector.shape_cast %2 : vector<1x36x128xf32> to vector<36x128xf32>
    %cst = arith.constant dense<0.000000e+00> : vector<8x128xf32>
    %4 = tpu.matmul %1, %3, %cst {dimension_numbers = #tpu.dot_dimension_numbers<[1], [0], [0], [1], [0, 0, 1, 1], [], []>} : vector<8x36xf32>, vector<36x128xf32>, vector<8x128xf32> -> vector<8x128xf32>
    %c0_6 = arith.constant 0 : index
    %c0_7 = arith.constant 0 : index
    %5 = vector.load %arg3[%c0_6, %c0_7] : memref<8x1xf32, #tpu.memory_space<vmem>>, vector<8x1xf32>
    %6 = vector.broadcast %5 : vector<8x1xf32> to vector<8x128xf32>
    %7 = arith.addf %4, %6 : vector<8x128xf32>
    %cst_8 = arith.constant 0.000000e+00 : f32
    %8 = vector.broadcast %cst_8 : f32 to vector<8x128xf32>
    %9 = arith.cmpf ogt, %7, %8 : vector<8x128xf32>
    %cst_9 = arith.constant 1.000000e-01 : f32
    %10 = vector.broadcast %cst_9 : f32 to vector<8x128xf32>
    %11 = arith.mulf %10, %7 : vector<8x128xf32>
    %12 = arith.select %9, %7, %11 : vector<8x128xi1>, vector<8x128xf32>
    %13 = vector.broadcast %0 : vector<1x128xf32> to vector<8x128xf32>
    %14 = arith.mulf %12, %13 : vector<8x128xf32>
    %c0_10 = arith.constant 0 : index
    %c0_11 = arith.constant 0 : index
    %c0_12 = arith.constant 0 : index
    %15 = vector.load %arg4[%c0_10, %c0_11, %c0_12] : memref<2x4x8xf32, #tpu.memory_space<vmem>>, vector<1x4x8xf32>
    %16 = vector.shape_cast %15 : vector<1x4x8xf32> to vector<4x8xf32>
    %cst_13 = arith.constant dense<0.000000e+00> : vector<4x128xf32>
    %17 = tpu.matmul %16, %14, %cst_13 {dimension_numbers = #tpu.dot_dimension_numbers<[1], [0], [0], [1], [0, 0, 1, 1], [], []>} : vector<4x8xf32>, vector<8x128xf32>, vector<4x128xf32> -> vector<4x128xf32>
    %c0_14 = arith.constant 0 : index
    %c0_15 = arith.constant 0 : index
    %c0_16 = arith.constant 0 : index
    %18 = vector.load %arg5[%c0_14, %c0_15, %c0_16] : memref<2x4x1xf32, #tpu.memory_space<vmem>>, vector<1x4x1xf32>
    %19 = vector.shape_cast %18 : vector<1x4x1xf32> to vector<4x1xf32>
    %20 = vector.broadcast %19 : vector<4x1xf32> to vector<4x128xf32>
    %21 = arith.addf %17, %20 : vector<4x128xf32>
    %cst_17 = arith.constant 0.000000e+00 : f32
    %22 = vector.broadcast %cst_17 : f32 to vector<4x128xf32>
    %23 = arith.cmpf ogt, %21, %22 : vector<4x128xf32>
    %cst_18 = arith.constant 1.000000e-01 : f32
    %24 = vector.broadcast %cst_18 : f32 to vector<4x128xf32>
    %25 = arith.mulf %24, %21 : vector<4x128xf32>
    %26 = arith.select %23, %21, %25 : vector<4x128xi1>, vector<4x128xf32>
    %27 = vector.broadcast %0 : vector<1x128xf32> to vector<4x128xf32>
    %28 = arith.mulf %26, %27 : vector<4x128xf32>
    %cst_19 = arith.constant 0.000000e+00 : f32
    %29 = vector.broadcast %cst_19 : f32 to vector<8x128xf32>
    %c11_i32 = arith.constant 11 : i32
    %30 = tpu.dynamic_rotate %28 by %c11_i32 dim 1 : vector<4x128xf32>, i32 -> vector<4x128xf32>
    %c0_20 = arith.constant 0 : index
    %c0_21 = arith.constant 0 : index
    %c0_22 = arith.constant 0 : index
    %c0_23 = arith.constant 0 : index
    %31 = vector.load %arg6[%c0_20, %c0_21, %c0_22, %c0_23] : memref<2x9x8x4xf32, #tpu.memory_space<vmem>>, vector<1x1x8x4xf32>
    %32 = vector.shape_cast %31 : vector<1x1x8x4xf32> to vector<8x4xf32>
    %cst_24 = arith.constant dense<0.000000e+00> : vector<8x128xf32>
    %33 = tpu.matmul %32, %30, %cst_24 {dimension_numbers = #tpu.dot_dimension_numbers<[1], [0], [0], [1], [0, 0, 1, 1], [], []>} : vector<8x4xf32>, vector<4x128xf32>, vector<8x128xf32> -> vector<8x128xf32>
    %34 = arith.addf %29, %33 : vector<8x128xf32>
    %c10_i32 = arith.constant 10 : i32
    %35 = tpu.dynamic_rotate %28 by %c10_i32 dim 1 : vector<4x128xf32>, i32 -> vector<4x128xf32>
    %c0_25 = arith.constant 0 : index
    %c1 = arith.constant 1 : index
    %c0_26 = arith.constant 0 : index
    %c0_27 = arith.constant 0 : index
    %36 = vector.load %arg6[%c0_25, %c1, %c0_26, %c0_27] : memref<2x9x8x4xf32, #tpu.memory_space<vmem>>, vector<1x1x8x4xf32>
    %37 = vector.shape_cast %36 : vector<1x1x8x4xf32> to vector<8x4xf32>
    %cst_28 = arith.constant dense<0.000000e+00> : vector<8x128xf32>
    %38 = tpu.matmul %37, %35, %cst_28 {dimension_numbers = #tpu.dot_dimension_numbers<[1], [0], [0], [1], [0, 0, 1, 1], [], []>} : vector<8x4xf32>, vector<4x128xf32>, vector<8x128xf32> -> vector<8x128xf32>
    %39 = arith.addf %34, %38 : vector<8x128xf32>
    %c9_i32 = arith.constant 9 : i32
    %40 = tpu.dynamic_rotate %28 by %c9_i32 dim 1 : vector<4x128xf32>, i32 -> vector<4x128xf32>
    %c0_29 = arith.constant 0 : index
    %c2 = arith.constant 2 : index
    %c0_30 = arith.constant 0 : index
    %c0_31 = arith.constant 0 : index
    %41 = vector.load %arg6[%c0_29, %c2, %c0_30, %c0_31] : memref<2x9x8x4xf32, #tpu.memory_space<vmem>>, vector<1x1x8x4xf32>
    %42 = vector.shape_cast %41 : vector<1x1x8x4xf32> to vector<8x4xf32>
    %cst_32 = arith.constant dense<0.000000e+00> : vector<8x128xf32>
    %43 = tpu.matmul %42, %40, %cst_32 {dimension_numbers = #tpu.dot_dimension_numbers<[1], [0], [0], [1], [0, 0, 1, 1], [], []>} : vector<8x4xf32>, vector<4x128xf32>, vector<8x128xf32> -> vector<8x128xf32>
    %44 = arith.addf %39, %43 : vector<8x128xf32>
    %c1_i32 = arith.constant 1 : i32
    %45 = tpu.dynamic_rotate %28 by %c1_i32 dim 1 : vector<4x128xf32>, i32 -> vector<4x128xf32>
    %c0_33 = arith.constant 0 : index
    %c3 = arith.constant 3 : index
    %c0_34 = arith.constant 0 : index
    %c0_35 = arith.constant 0 : index
    %46 = vector.load %arg6[%c0_33, %c3, %c0_34, %c0_35] : memref<2x9x8x4xf32, #tpu.memory_space<vmem>>, vector<1x1x8x4xf32>
    %47 = vector.shape_cast %46 : vector<1x1x8x4xf32> to vector<8x4xf32>
    %cst_36 = arith.constant dense<0.000000e+00> : vector<8x128xf32>
    %48 = tpu.matmul %47, %45, %cst_36 {dimension_numbers = #tpu.dot_dimension_numbers<[1], [0], [0], [1], [0, 0, 1, 1], [], []>} : vector<8x4xf32>, vector<4x128xf32>, vector<8x128xf32> -> vector<8x128xf32>
    %49 = arith.addf %44, %48 : vector<8x128xf32>
    %c0_37 = arith.constant 0 : index
    %c4 = arith.constant 4 : index
    %c0_38 = arith.constant 0 : index
    %c0_39 = arith.constant 0 : index
    %50 = vector.load %arg6[%c0_37, %c4, %c0_38, %c0_39] : memref<2x9x8x4xf32, #tpu.memory_space<vmem>>, vector<1x1x8x4xf32>
    %51 = vector.shape_cast %50 : vector<1x1x8x4xf32> to vector<8x4xf32>
    %cst_40 = arith.constant dense<0.000000e+00> : vector<8x128xf32>
    %52 = tpu.matmul %51, %28, %cst_40 {dimension_numbers = #tpu.dot_dimension_numbers<[1], [0], [0], [1], [0, 0, 1, 1], [], []>} : vector<8x4xf32>, vector<4x128xf32>, vector<8x128xf32> -> vector<8x128xf32>
    %53 = arith.addf %49, %52 : vector<8x128xf32>
    %c127_i32 = arith.constant 127 : i32
    %54 = tpu.dynamic_rotate %28 by %c127_i32 dim 1 : vector<4x128xf32>, i32 -> vector<4x128xf32>
    %c0_41 = arith.constant 0 : index
    %c5 = arith.constant 5 : index
    %c0_42 = arith.constant 0 : index
    %c0_43 = arith.constant 0 : index
    %55 = vector.load %arg6[%c0_41, %c5, %c0_42, %c0_43] : memref<2x9x8x4xf32, #tpu.memory_space<vmem>>, vector<1x1x8x4xf32>
    %56 = vector.shape_cast %55 : vector<1x1x8x4xf32> to vector<8x4xf32>
    %cst_44 = arith.constant dense<0.000000e+00> : vector<8x128xf32>
    %57 = tpu.matmul %56, %54, %cst_44 {dimension_numbers = #tpu.dot_dimension_numbers<[1], [0], [0], [1], [0, 0, 1, 1], [], []>} : vector<8x4xf32>, vector<4x128xf32>, vector<8x128xf32> -> vector<8x128xf32>
    %58 = arith.addf %53, %57 : vector<8x128xf32>
    %c119_i32 = arith.constant 119 : i32
    %59 = tpu.dynamic_rotate %28 by %c119_i32 dim 1 : vector<4x128xf32>, i32 -> vector<4x128xf32>
    %c0_45 = arith.constant 0 : index
    %c6 = arith.constant 6 : index
    %c0_46 = arith.constant 0 : index
    %c0_47 = arith.constant 0 : index
    %60 = vector.load %arg6[%c0_45, %c6, %c0_46, %c0_47] : memref<2x9x8x4xf32, #tpu.memory_space<vmem>>, vector<1x1x8x4xf32>
    %61 = vector.shape_cast %60 : vector<1x1x8x4xf32> to vector<8x4xf32>
    %cst_48 = arith.constant dense<0.000000e+00> : vector<8x128xf32>
    %62 = tpu.matmul %61, %59, %cst_48 {dimension_numbers = #tpu.dot_dimension_numbers<[1], [0], [0], [1], [0, 0, 1, 1], [], []>} : vector<8x4xf32>, vector<4x128xf32>, vector<8x128xf32> -> vector<8x128xf32>
    %63 = arith.addf %58, %62 : vector<8x128xf32>
    %c118_i32 = arith.constant 118 : i32
    %64 = tpu.dynamic_rotate %28 by %c118_i32 dim 1 : vector<4x128xf32>, i32 -> vector<4x128xf32>
    %c0_49 = arith.constant 0 : index
    %c7 = arith.constant 7 : index
    %c0_50 = arith.constant 0 : index
    %c0_51 = arith.constant 0 : index
    %65 = vector.load %arg6[%c0_49, %c7, %c0_50, %c0_51] : memref<2x9x8x4xf32, #tpu.memory_space<vmem>>, vector<1x1x8x4xf32>
    %66 = vector.shape_cast %65 : vector<1x1x8x4xf32> to vector<8x4xf32>
    %cst_52 = arith.constant dense<0.000000e+00> : vector<8x128xf32>
    %67 = tpu.matmul %66, %64, %cst_52 {dimension_numbers = #tpu.dot_dimension_numbers<[1], [0], [0], [1], [0, 0, 1, 1], [], []>} : vector<8x4xf32>, vector<4x128xf32>, vector<8x128xf32> -> vector<8x128xf32>
    %68 = arith.addf %63, %67 : vector<8x128xf32>
    %c117_i32 = arith.constant 117 : i32
    %69 = tpu.dynamic_rotate %28 by %c117_i32 dim 1 : vector<4x128xf32>, i32 -> vector<4x128xf32>
    %c0_53 = arith.constant 0 : index
    %c8 = arith.constant 8 : index
    %c0_54 = arith.constant 0 : index
    %c0_55 = arith.constant 0 : index
    %70 = vector.load %arg6[%c0_53, %c8, %c0_54, %c0_55] : memref<2x9x8x4xf32, #tpu.memory_space<vmem>>, vector<1x1x8x4xf32>
    %71 = vector.shape_cast %70 : vector<1x1x8x4xf32> to vector<8x4xf32>
    %cst_56 = arith.constant dense<0.000000e+00> : vector<8x128xf32>
    %72 = tpu.matmul %71, %69, %cst_56 {dimension_numbers = #tpu.dot_dimension_numbers<[1], [0], [0], [1], [0, 0, 1, 1], [], []>} : vector<8x4xf32>, vector<4x128xf32>, vector<8x128xf32> -> vector<8x128xf32>
    %73 = arith.addf %68, %72 : vector<8x128xf32>
    %c0_57 = arith.constant 0 : index
    %c0_58 = arith.constant 0 : index
    %c0_59 = arith.constant 0 : index
    %74 = vector.load %arg7[%c0_57, %c0_58, %c0_59] : memref<2x8x1xf32, #tpu.memory_space<vmem>>, vector<1x8x1xf32>
    %75 = vector.shape_cast %74 : vector<1x8x1xf32> to vector<8x1xf32>
    %76 = vector.broadcast %75 : vector<8x1xf32> to vector<8x128xf32>
    %77 = arith.addf %73, %76 : vector<8x128xf32>
    %cst_60 = arith.constant 0.000000e+00 : f32
    %78 = vector.broadcast %cst_60 : f32 to vector<8x128xf32>
    %79 = arith.cmpf ogt, %77, %78 : vector<8x128xf32>
    %cst_61 = arith.constant 1.000000e-01 : f32
    %80 = vector.broadcast %cst_61 : f32 to vector<8x128xf32>
    %81 = arith.mulf %80, %77 : vector<8x128xf32>
    %82 = arith.select %79, %77, %81 : vector<8x128xi1>, vector<8x128xf32>
    %83 = vector.broadcast %0 : vector<1x128xf32> to vector<8x128xf32>
    %84 = arith.mulf %82, %83 : vector<8x128xf32>
    %85 = arith.addf %14, %84 : vector<8x128xf32>
    %c1_62 = arith.constant 1 : index
    %c0_63 = arith.constant 0 : index
    %c0_64 = arith.constant 0 : index
    %86 = vector.load %arg4[%c1_62, %c0_63, %c0_64] : memref<2x4x8xf32, #tpu.memory_space<vmem>>, vector<1x4x8xf32>
    %87 = vector.shape_cast %86 : vector<1x4x8xf32> to vector<4x8xf32>
    %cst_65 = arith.constant dense<0.000000e+00> : vector<4x128xf32>
    %88 = tpu.matmul %87, %85, %cst_65 {dimension_numbers = #tpu.dot_dimension_numbers<[1], [0], [0], [1], [0, 0, 1, 1], [], []>} : vector<4x8xf32>, vector<8x128xf32>, vector<4x128xf32> -> vector<4x128xf32>
    %c1_66 = arith.constant 1 : index
    %c0_67 = arith.constant 0 : index
    %c0_68 = arith.constant 0 : index
    %89 = vector.load %arg5[%c1_66, %c0_67, %c0_68] : memref<2x4x1xf32, #tpu.memory_space<vmem>>, vector<1x4x1xf32>
    %90 = vector.shape_cast %89 : vector<1x4x1xf32> to vector<4x1xf32>
    %91 = vector.broadcast %90 : vector<4x1xf32> to vector<4x128xf32>
    %92 = arith.addf %88, %91 : vector<4x128xf32>
    %cst_69 = arith.constant 0.000000e+00 : f32
    %93 = vector.broadcast %cst_69 : f32 to vector<4x128xf32>
    %94 = arith.cmpf ogt, %92, %93 : vector<4x128xf32>
    %cst_70 = arith.constant 1.000000e-01 : f32
    %95 = vector.broadcast %cst_70 : f32 to vector<4x128xf32>
    %96 = arith.mulf %95, %92 : vector<4x128xf32>
    %97 = arith.select %94, %92, %96 : vector<4x128xi1>, vector<4x128xf32>
    %98 = vector.broadcast %0 : vector<1x128xf32> to vector<4x128xf32>
    %99 = arith.mulf %97, %98 : vector<4x128xf32>
    %cst_71 = arith.constant 0.000000e+00 : f32
    %100 = vector.broadcast %cst_71 : f32 to vector<8x128xf32>
    %c11_i32_72 = arith.constant 11 : i32
    %101 = tpu.dynamic_rotate %99 by %c11_i32_72 dim 1 : vector<4x128xf32>, i32 -> vector<4x128xf32>
    %c1_73 = arith.constant 1 : index
    %c0_74 = arith.constant 0 : index
    %c0_75 = arith.constant 0 : index
    %c0_76 = arith.constant 0 : index
    %102 = vector.load %arg6[%c1_73, %c0_74, %c0_75, %c0_76] : memref<2x9x8x4xf32, #tpu.memory_space<vmem>>, vector<1x1x8x4xf32>
    %103 = vector.shape_cast %102 : vector<1x1x8x4xf32> to vector<8x4xf32>
    %cst_77 = arith.constant dense<0.000000e+00> : vector<8x128xf32>
    %104 = tpu.matmul %103, %101, %cst_77 {dimension_numbers = #tpu.dot_dimension_numbers<[1], [0], [0], [1], [0, 0, 1, 1], [], []>} : vector<8x4xf32>, vector<4x128xf32>, vector<8x128xf32> -> vector<8x128xf32>
    %105 = arith.addf %100, %104 : vector<8x128xf32>
    %c10_i32_78 = arith.constant 10 : i32
    %106 = tpu.dynamic_rotate %99 by %c10_i32_78 dim 1 : vector<4x128xf32>, i32 -> vector<4x128xf32>
    %c1_79 = arith.constant 1 : index
    %c1_80 = arith.constant 1 : index
    %c0_81 = arith.constant 0 : index
    %c0_82 = arith.constant 0 : index
    %107 = vector.load %arg6[%c1_79, %c1_80, %c0_81, %c0_82] : memref<2x9x8x4xf32, #tpu.memory_space<vmem>>, vector<1x1x8x4xf32>
    %108 = vector.shape_cast %107 : vector<1x1x8x4xf32> to vector<8x4xf32>
    %cst_83 = arith.constant dense<0.000000e+00> : vector<8x128xf32>
    %109 = tpu.matmul %108, %106, %cst_83 {dimension_numbers = #tpu.dot_dimension_numbers<[1], [0], [0], [1], [0, 0, 1, 1], [], []>} : vector<8x4xf32>, vector<4x128xf32>, vector<8x128xf32> -> vector<8x128xf32>
    %110 = arith.addf %105, %109 : vector<8x128xf32>
    %c9_i32_84 = arith.constant 9 : i32
    %111 = tpu.dynamic_rotate %99 by %c9_i32_84 dim 1 : vector<4x128xf32>, i32 -> vector<4x128xf32>
    %c1_85 = arith.constant 1 : index
    %c2_86 = arith.constant 2 : index
    %c0_87 = arith.constant 0 : index
    %c0_88 = arith.constant 0 : index
    %112 = vector.load %arg6[%c1_85, %c2_86, %c0_87, %c0_88] : memref<2x9x8x4xf32, #tpu.memory_space<vmem>>, vector<1x1x8x4xf32>
    %113 = vector.shape_cast %112 : vector<1x1x8x4xf32> to vector<8x4xf32>
    %cst_89 = arith.constant dense<0.000000e+00> : vector<8x128xf32>
    %114 = tpu.matmul %113, %111, %cst_89 {dimension_numbers = #tpu.dot_dimension_numbers<[1], [0], [0], [1], [0, 0, 1, 1], [], []>} : vector<8x4xf32>, vector<4x128xf32>, vector<8x128xf32> -> vector<8x128xf32>
    %115 = arith.addf %110, %114 : vector<8x128xf32>
    %c1_i32_90 = arith.constant 1 : i32
    %116 = tpu.dynamic_rotate %99 by %c1_i32_90 dim 1 : vector<4x128xf32>, i32 -> vector<4x128xf32>
    %c1_91 = arith.constant 1 : index
    %c3_92 = arith.constant 3 : index
    %c0_93 = arith.constant 0 : index
    %c0_94 = arith.constant 0 : index
    %117 = vector.load %arg6[%c1_91, %c3_92, %c0_93, %c0_94] : memref<2x9x8x4xf32, #tpu.memory_space<vmem>>, vector<1x1x8x4xf32>
    %118 = vector.shape_cast %117 : vector<1x1x8x4xf32> to vector<8x4xf32>
    %cst_95 = arith.constant dense<0.000000e+00> : vector<8x128xf32>
    %119 = tpu.matmul %118, %116, %cst_95 {dimension_numbers = #tpu.dot_dimension_numbers<[1], [0], [0], [1], [0, 0, 1, 1], [], []>} : vector<8x4xf32>, vector<4x128xf32>, vector<8x128xf32> -> vector<8x128xf32>
    %120 = arith.addf %115, %119 : vector<8x128xf32>
    %c1_96 = arith.constant 1 : index
    %c4_97 = arith.constant 4 : index
    %c0_98 = arith.constant 0 : index
    %c0_99 = arith.constant 0 : index
    %121 = vector.load %arg6[%c1_96, %c4_97, %c0_98, %c0_99] : memref<2x9x8x4xf32, #tpu.memory_space<vmem>>, vector<1x1x8x4xf32>
    %122 = vector.shape_cast %121 : vector<1x1x8x4xf32> to vector<8x4xf32>
    %cst_100 = arith.constant dense<0.000000e+00> : vector<8x128xf32>
    %123 = tpu.matmul %122, %99, %cst_100 {dimension_numbers = #tpu.dot_dimension_numbers<[1], [0], [0], [1], [0, 0, 1, 1], [], []>} : vector<8x4xf32>, vector<4x128xf32>, vector<8x128xf32> -> vector<8x128xf32>
    %124 = arith.addf %120, %123 : vector<8x128xf32>
    %c127_i32_101 = arith.constant 127 : i32
    %125 = tpu.dynamic_rotate %99 by %c127_i32_101 dim 1 : vector<4x128xf32>, i32 -> vector<4x128xf32>
    %c1_102 = arith.constant 1 : index
    %c5_103 = arith.constant 5 : index
    %c0_104 = arith.constant 0 : index
    %c0_105 = arith.constant 0 : index
    %126 = vector.load %arg6[%c1_102, %c5_103, %c0_104, %c0_105] : memref<2x9x8x4xf32, #tpu.memory_space<vmem>>, vector<1x1x8x4xf32>
    %127 = vector.shape_cast %126 : vector<1x1x8x4xf32> to vector<8x4xf32>
    %cst_106 = arith.constant dense<0.000000e+00> : vector<8x128xf32>
    %128 = tpu.matmul %127, %125, %cst_106 {dimension_numbers = #tpu.dot_dimension_numbers<[1], [0], [0], [1], [0, 0, 1, 1], [], []>} : vector<8x4xf32>, vector<4x128xf32>, vector<8x128xf32> -> vector<8x128xf32>
    %129 = arith.addf %124, %128 : vector<8x128xf32>
    %c119_i32_107 = arith.constant 119 : i32
    %130 = tpu.dynamic_rotate %99 by %c119_i32_107 dim 1 : vector<4x128xf32>, i32 -> vector<4x128xf32>
    %c1_108 = arith.constant 1 : index
    %c6_109 = arith.constant 6 : index
    %c0_110 = arith.constant 0 : index
    %c0_111 = arith.constant 0 : index
    %131 = vector.load %arg6[%c1_108, %c6_109, %c0_110, %c0_111] : memref<2x9x8x4xf32, #tpu.memory_space<vmem>>, vector<1x1x8x4xf32>
    %132 = vector.shape_cast %131 : vector<1x1x8x4xf32> to vector<8x4xf32>
    %cst_112 = arith.constant dense<0.000000e+00> : vector<8x128xf32>
    %133 = tpu.matmul %132, %130, %cst_112 {dimension_numbers = #tpu.dot_dimension_numbers<[1], [0], [0], [1], [0, 0, 1, 1], [], []>} : vector<8x4xf32>, vector<4x128xf32>, vector<8x128xf32> -> vector<8x128xf32>
    %134 = arith.addf %129, %133 : vector<8x128xf32>
    %c118_i32_113 = arith.constant 118 : i32
    %135 = tpu.dynamic_rotate %99 by %c118_i32_113 dim 1 : vector<4x128xf32>, i32 -> vector<4x128xf32>
    %c1_114 = arith.constant 1 : index
    %c7_115 = arith.constant 7 : index
    %c0_116 = arith.constant 0 : index
    %c0_117 = arith.constant 0 : index
    %136 = vector.load %arg6[%c1_114, %c7_115, %c0_116, %c0_117] : memref<2x9x8x4xf32, #tpu.memory_space<vmem>>, vector<1x1x8x4xf32>
    %137 = vector.shape_cast %136 : vector<1x1x8x4xf32> to vector<8x4xf32>
    %cst_118 = arith.constant dense<0.000000e+00> : vector<8x128xf32>
    %138 = tpu.matmul %137, %135, %cst_118 {dimension_numbers = #tpu.dot_dimension_numbers<[1], [0], [0], [1], [0, 0, 1, 1], [], []>} : vector<8x4xf32>, vector<4x128xf32>, vector<8x128xf32> -> vector<8x128xf32>
    %139 = arith.addf %134, %138 : vector<8x128xf32>
    %c117_i32_119 = arith.constant 117 : i32
    %140 = tpu.dynamic_rotate %99 by %c117_i32_119 dim 1 : vector<4x128xf32>, i32 -> vector<4x128xf32>
    %c1_120 = arith.constant 1 : index
    %c8_121 = arith.constant 8 : index
    %c0_122 = arith.constant 0 : index
    %c0_123 = arith.constant 0 : index
    %141 = vector.load %arg6[%c1_120, %c8_121, %c0_122, %c0_123] : memref<2x9x8x4xf32, #tpu.memory_space<vmem>>, vector<1x1x8x4xf32>
    %142 = vector.shape_cast %141 : vector<1x1x8x4xf32> to vector<8x4xf32>
    %cst_124 = arith.constant dense<0.000000e+00> : vector<8x128xf32>
    %143 = tpu.matmul %142, %140, %cst_124 {dimension_numbers = #tpu.dot_dimension_numbers<[1], [0], [0], [1], [0, 0, 1, 1], [], []>} : vector<8x4xf32>, vector<4x128xf32>, vector<8x128xf32> -> vector<8x128xf32>
    %144 = arith.addf %139, %143 : vector<8x128xf32>
    %c1_125 = arith.constant 1 : index
    %c0_126 = arith.constant 0 : index
    %c0_127 = arith.constant 0 : index
    %145 = vector.load %arg7[%c1_125, %c0_126, %c0_127] : memref<2x8x1xf32, #tpu.memory_space<vmem>>, vector<1x8x1xf32>
    %146 = vector.shape_cast %145 : vector<1x8x1xf32> to vector<8x1xf32>
    %147 = vector.broadcast %146 : vector<8x1xf32> to vector<8x128xf32>
    %148 = arith.addf %144, %147 : vector<8x128xf32>
    %cst_128 = arith.constant 0.000000e+00 : f32
    %149 = vector.broadcast %cst_128 : f32 to vector<8x128xf32>
    %150 = arith.cmpf ogt, %148, %149 : vector<8x128xf32>
    %cst_129 = arith.constant 1.000000e-01 : f32
    %151 = vector.broadcast %cst_129 : f32 to vector<8x128xf32>
    %152 = arith.mulf %151, %148 : vector<8x128xf32>
    %153 = arith.select %150, %148, %152 : vector<8x128xi1>, vector<8x128xf32>
    %154 = vector.broadcast %0 : vector<1x128xf32> to vector<8x128xf32>
    %155 = arith.mulf %153, %154 : vector<8x128xf32>
    %156 = arith.addf %85, %155 : vector<8x128xf32>
    %157 = vector.shape_cast %156 : vector<8x128xf32> to vector<1x8x128xf32>
    %c0_130 = arith.constant 0 : index
    %c0_131 = arith.constant 0 : index
    %c0_132 = arith.constant 0 : index
    %158 = vector.load %arg9[%c0_130, %c0_131, %c0_132] : memref<1x8x128xf32, #tpu.memory_space<vmem>>, vector<1x8x128xf32>
    tpu.vector_store %arg9[%c0_130, %c0_131, %c0_132], %157 {strides = array<i32>} : memref<1x8x128xf32, #tpu.memory_space<vmem>>, vector<1x8x128xf32>,
    return
  }
  func.func @transform_0(%arg0: i32) -> (i32, i32, i32) {
    %c0_i32 = arith.constant 0 : i32
    %c0_i32_0 = arith.constant 0 : i32
    %c0_i32_1 = arith.constant 0 : i32
    return %arg0, %c0_i32, %c0_i32_0 : i32, i32, i32
  }
  func.func @transform_1(%arg0: i32) -> (i32, i32) {
    %c0_i32 = arith.constant 0 : i32
    %c0_i32_0 = arith.constant 0 : i32
    %c0_i32_1 = arith.constant 0 : i32
    return %c0_i32, %c0_i32_0 : i32, i32
  }
  func.func @transform_2(%arg0: i32) -> (i32, i32) {
    %c0_i32 = arith.constant 0 : i32
    %c0_i32_0 = arith.constant 0 : i32
    %c0_i32_1 = arith.constant 0 : i32
    return %c0_i32, %c0_i32_0 : i32, i32
  }
  func.func @transform_3(%arg0: i32) -> (i32, i32, i32) {
    %c0_i32 = arith.constant 0 : i32
    %c0_i32_0 = arith.constant 0 : i32
    %c0_i32_1 = arith.constant 0 : i32
    %c0_i32_2 = arith.constant 0 : i32
    return %c0_i32, %c0_i32_0, %c0_i32_1 : i32, i32, i32
  }
  func.func @transform_4(%arg0: i32) -> (i32, i32, i32) {
    %c0_i32 = arith.constant 0 : i32
    %c0_i32_0 = arith.constant 0 : i32
    %c0_i32_1 = arith.constant 0 : i32
    %c0_i32_2 = arith.constant 0 : i32
    return %c0_i32, %c0_i32_0, %c0_i32_1 : i32, i32, i32
  }
  func.func @transform_5(%arg0: i32) -> (i32, i32, i32, i32) {
    %c0_i32 = arith.constant 0 : i32
    %c0_i32_0 = arith.constant 0 : i32
    %c0_i32_1 = arith.constant 0 : i32
    %c0_i32_2 = arith.constant 0 : i32
    %c0_i32_3 = arith.constant 0 : i32
    return %c0_i32, %c0_i32_0, %c0_i32_1, %c0_i32_2 : i32, i32, i32, i32
  }
  func.func @transform_6(%arg0: i32) -> (i32, i32, i32) {
    %c0_i32 = arith.constant 0 : i32
    %c0_i32_0 = arith.constant 0 : i32
    %c0_i32_1 = arith.constant 0 : i32
    %c0_i32_2 = arith.constant 0 : i32
    return %c0_i32, %c0_i32_0, %c0_i32_1 : i32, i32, i32
  }
  func.func @transform_7(%arg0: i32) -> (i32, i32) {
    %c0_i32 = arith.constant 0 : i32
    %c0_i32_0 = arith.constant 0 : i32
    %c0_i32_1 = arith.constant 0 : i32
    return %c0_i32, %c0_i32_0 : i32, i32
  }
  func.func @transform_8(%arg0: i32) -> (i32, i32, i32) {
    %c0_i32 = arith.constant 0 : i32
    %c0_i32_0 = arith.constant 0 : i32
    %c0_i32_1 = arith.constant 0 : i32
    return %arg0, %c0_i32, %c0_i32_0 : i32, i32, i32
  }
}

</mosaic_0001>

<llo_original>
// kernel: tpu_custom_call.1
$region0: #{tpu_custom_call.1}
  #allocation0 [shape = 'u32[]', space=smem, size = 0x4, offset = 0x4, fixed_abs, tag = 'smem constant byte address 0x4 - core index']
  #allocation1 [shape = 'u32[144,128]{1,0:T(1,128)}', space=vmem, size = 0x12000, scoped, tag = 'internal scratch']
  %s0 = inlined_call_operand.vmem [shape: f32[2,36,128], index: 0, kind: input, shape index: {}]
  %s1 = inlined_call_operand.vmem [shape: f32[8,36], index: 1, kind: input, shape index: {}]
  %s2 = inlined_call_operand.vmem [shape: f32[8,1], index: 2, kind: input, shape index: {}]
  %s3 = inlined_call_operand.vmem [shape: f32[2,4,8], index: 3, kind: input, shape index: {}]
  %s4 = inlined_call_operand.vmem [shape: f32[2,4,1], index: 4, kind: input, shape index: {}]
  %s5 = inlined_call_operand.vmem [shape: f32[2,9,8,4], index: 5, kind: input, shape index: {}]
  %s6 = inlined_call_operand.vmem [shape: f32[2,8,1], index: 6, kind: input, shape index: {}]
  %s7 = inlined_call_operand.vmem [shape: f32[1,128], index: 7, kind: input, shape index: {}]
  %s8 = inlined_call_operand.hbm [shape: f32[2,8,128], index: 8, kind: output, shape index: {}]
  %s9 = sld [smem:[#allocation0]]
  $region65: #{tpu_custom_call.1} parent=0
    _
  %s11 = ssub.s32 1, %s9
  %s12 = scalar_select 0, %s11, %s9
  $region1: #{tpu_custom_call.1} parent=0
    #allocation2 [shape = 'u8[8192]{0}', space=vmem, size = 0x2000, scoped, tag = 'output window, operand 0']
    #allocation3 [shape = 's32[2]{0}', space=sflag, size = 0x8, scoped, tag = 'scoped memory for tpu_custom_call.1']
    %13 = vsyncpa [#allocation3], 0
    %s14 = scalar_lea.sflag [#allocation3], 1
    %15 = vsyncpa %s14, 0
    loop: start=0, step=1, limit=4
    $region2: #{tpu_custom_call.1} parent=1 // loop_pre_header
      _
    $region3: #{tpu_custom_call.1} parent=1 // loop_header
      %s17 = sphi 0, %s21
      %p18 = scmp.ge.s32.totalorder %s17, 4
      %s27 = sphi 0, %s29
      %s30 = sphi 0, %s27
      %s31 = sphi 0, %s30
      %s47 = sphi 0, %s31
      %s51 = sphi 0, %s51
      %s53 = sphi 0, %s51
      %s54 = sphi 0, %s53
      %s68 = sphi 0, %s54
      %s72 = sphi 0, %s72
      %s74 = sphi 0, %s72
      %s75 = sphi 0, %s74
      %s89 = sphi 0, %s75
      %s93 = sphi 0, %s93
      %s95 = sphi 0, %s93
      %s96 = sphi 0, %s95
      %s110 = sphi 0, %s96
      %s114 = sphi 0, %s114
      %s116 = sphi 0, %s114
      %s117 = sphi 0, %s116
      %s131 = sphi 0, %s117
      %s135 = sphi 0, %s135
      %s137 = sphi 0, %s135
      %s138 = sphi 0, %s137
      %s152 = sphi 0, %s138
      %s156 = sphi 0, %s156
      %s158 = sphi 0, %s156
      %s159 = sphi 0, %s158
      %s173 = sphi 0, %s159
      %s177 = sphi 0, %s177
      %s179 = sphi 0, %s177
      %s180 = sphi 0, %s179
      %s194 = sphi 0, %s180
      %s200 = sphi 0, %s202
      %s203 = sphi 0, %s200
      %s204 = sphi 0, %s203
      %s220 = sphi 0, %s204
    $region4: #{tpu_custom_call.1} parent=1 // loop_header_branch
      %20 = sbr.rel (%p18) target = $region8
    $region5: #{tpu_custom_call.1} parent=1 // loop_body
      %s22 = ssub.s32 %s17, 1
      %s23 = ssub.s32 %s17, 2
      %s24 = sadd.s32 %s17, 1
      %s25 = ssub.s32 %s17, %s24
      %p26 = scmp.eq.s32.totalorder %s25, 0
      %s28 = sadd.s32 %s27, 1
      %s29 = scalar_select %p26, %s27, %s28
      %p32 = pneg %p26
      %p33 = scmp.eq.s32.totalorder %s17, 1
      %p34 = por %p32, %p33
      %p35 = scmp.ne.s32.totalorder %s27, %s30
      %p36 = scmp.eq.s32.totalorder %s17, 0
      %p37 = por %p35, %p36
      %p38 = scmp.ne.s32.totalorder %s27, %s30
      %p39 = scmp.eq.s32.totalorder %s22, 1
      %p40 = por %p38, %p39
      %p41 = scmp.ne.s32.totalorder %s30, %s31
      %p42 = scmp.eq.s32.totalorder %s22, 0
      %p43 = por %p41, %p42
      %p44 = scmp.ne.s32.totalorder %s30, %s31
      %p45 = scmp.eq.s32.totalorder %s23, 1
      %p46 = por %p44, %p45
      %p48 = scmp.ne.s32.totalorder %s31, %s47
      %p49 = scmp.eq.s32.totalorder %s23, 0
      %p50 = por %p48, %p49
      %s52 = sadd.s32 %s51, 1
      %p55 = scmp.eq.s32.totalorder %s17, 1
      %p56 = scmp.ne.s32.totalorder %s51, %s53
      %p57 = scmp.eq.s32.totalorder %s17, 0
      %p58 = por %p56, %p57
      %p59 = scmp.ne.s32.totalorder %s51, %s53
      %p60 = scmp.eq.s32.totalorder %s22, 1
      %p61 = por %p59, %p60
      %p62 = scmp.ne.s32.totalorder %s53, %s54
      %p63 = scmp.eq.s32.totalorder %s22, 0
      %p64 = por %p62, %p63
      %p65 = scmp.ne.s32.totalorder %s53, %s54
      %p66 = scmp.eq.s32.totalorder %s23, 1
      %p67 = por %p65, %p66
      %p69 = scmp.ne.s32.totalorder %s54, %s68
      %p70 = scmp.eq.s32.totalorder %s23, 0
      %p71 = por %p69, %p70
      %s73 = sadd.s32 %s72, 1
      %p76 = scmp.eq.s32.totalorder %s17, 1
      %p77 = scmp.ne.s32.totalorder %s72, %s74
      %p78 = scmp.eq.s32.totalorder %s17, 0
      %p79 = por %p77, %p78
      %p80 = scmp.ne.s32.totalorder %s72, %s74
      %p81 = scmp.eq.s32.totalorder %s22, 1
      %p82 = por %p80, %p81
      %p83 = scmp.ne.s32.totalorder %s74, %s75
      %p84 = scmp.eq.s32.totalorder %s22, 0
      %p85 = por %p83, %p84
      %p86 = scmp.ne.s32.totalorder %s74, %s75
      %p87 = scmp.eq.s32.totalorder %s23, 1
      %p88 = por %p86, %p87
      %p90 = scmp.ne.s32.totalorder %s75, %s89
      %p91 = scmp.eq.s32.totalorder %s23, 0
      %p92 = por %p90, %p91
      %s94 = sadd.s32 %s93, 1
      %p97 = scmp.eq.s32.totalorder %s17, 1
      %p98 = scmp.ne.s32.totalorder %s93, %s95
      %p99 = scmp.eq.s32.totalorder %s17, 0
      %p100 = por %p98, %p99
      %p101 = scmp.ne.s32.totalorder %s93, %s95
      %p102 = scmp.eq.s32.totalorder %s22, 1
      %p103 = por %p101, %p102
      %p104 = scmp.ne.s32.totalorder %s95, %s96
      %p105 = scmp.eq.s32.totalorder %s22, 0
      %p106 = por %p104, %p105
      %p107 = scmp.ne.s32.totalorder %s95, %s96
      %p108 = scmp.eq.s32.totalorder %s23, 1
      %p109 = por %p107, %p108
      %p111 = scmp.ne.s32.totalorder %s96, %s110
      %p112 = scmp.eq.s32.totalorder %s23, 0
      %p113 = por %p111, %p112
      %s115 = sadd.s32 %s114, 1
      %p118 = scmp.eq.s32.totalorder %s17, 1
      %p119 = scmp.ne.s32.totalorder %s114, %s116
      %p120 = scmp.eq.s32.totalorder %s17, 0
      %p121 = por %p119, %p120
      %p122 = scmp.ne.s32.totalorder %s114, %s116
      %p123 = scmp.eq.s32.totalorder %s22, 1
      %p124 = por %p122, %p123
      %p125 = scmp.ne.s32.totalorder %s116, %s117
      %p126 = scmp.eq.s32.totalorder %s22, 0
      %p127 = por %p125, %p126
      %p128 = scmp.ne.s32.totalorder %s116, %s117
      %p129 = scmp.eq.s32.totalorder %s23, 1
      %p130 = por %p128, %p129
      %p132 = scmp.ne.s32.totalorder %s117, %s131
      %p133 = scmp.eq.s32.totalorder %s23, 0
      %p134 = por %p132, %p133
      %s136 = sadd.s32 %s135, 1
      %p139 = scmp.eq.s32.totalorder %s17, 1
      %p140 = scmp.ne.s32.totalorder %s135, %s137
      %p141 = scmp.eq.s32.totalorder %s17, 0
      %p142 = por %p140, %p141
      %p143 = scmp.ne.s32.totalorder %s135, %s137
      %p144 = scmp.eq.s32.totalorder %s22, 1
      %p145 = por %p143, %p144
      %p146 = scmp.ne.s32.totalorder %s137, %s138
      %p147 = scmp.eq.s32.totalorder %s22, 0
      %p148 = por %p146, %p147
      %p149 = scmp.ne.s32.totalorder %s137, %s138
      %p150 = scmp.eq.s32.totalorder %s23, 1
      %p151 = por %p149, %p150
      %p153 = scmp.ne.s32.totalorder %s138, %s152
      %p154 = scmp.eq.s32.totalorder %s23, 0
      %p155 = por %p153, %p154
      %s157 = sadd.s32 %s156, 1
      %p160 = scmp.eq.s32.totalorder %s17, 1
      %p161 = scmp.ne.s32.totalorder %s156, %s158
      %p162 = scmp.eq.s32.totalorder %s17, 0
      %p163 = por %p161, %p162
      %p164 = scmp.ne.s32.totalorder %s156, %s158
      %p165 = scmp.eq.s32.totalorder %s22, 1
      %p166 = por %p164, %p165
      %p167 = scmp.ne.s32.totalorder %s158, %s159
      %p168 = scmp.eq.s32.totalorder %s22, 0
      %p169 = por %p167, %p168
      %p170 = scmp.ne.s32.totalorder %s158, %s159
      %p171 = scmp.eq.s32.totalorder %s23, 1
      %p172 = por %p170, %p171
      %p174 = scmp.ne.s32.totalorder %s159, %s173
      %p175 = scmp.eq.s32.totalorder %s23, 0
      %p176 = por %p174, %p175
      %s178 = sadd.s32 %s177, 1
      %p181 = scmp.eq.s32.totalorder %s17, 1
      %p182 = scmp.ne.s32.totalorder %s177, %s179
      %p183 = scmp.eq.s32.totalorder %s17, 0
      %p184 = por %p182, %p183
      %p185 = scmp.ne.s32.totalorder %s177, %s179
      %p186 = scmp.eq.s32.totalorder %s22, 1
      %p187 = por %p185, %p186
      %p188 = scmp.ne.s32.totalorder %s179, %s180
      %p189 = scmp.eq.s32.totalorder %s22, 0
      %p190 = por %p188, %p189
      %p191 = scmp.ne.s32.totalorder %s179, %s180
      %p192 = scmp.eq.s32.totalorder %s23, 1
      %p193 = por %p191, %p192
      %p195 = scmp.ne.s32.totalorder %s180, %s194
      %p196 = scmp.eq.s32.totalorder %s23, 0
      %p197 = por %p195, %p196
      %s198 = ssub.s32 %s17, %s24
      %p199 = scmp.eq.s32.totalorder %s198, 0
      %s201 = sadd.s32 %s200, 1
      %s202 = scalar_select %p199, %s200, %s201
      %p205 = pneg %p199
      %p206 = scmp.eq.s32.totalorder %s17, 1
      %p207 = por %p205, %p206
      %p208 = scmp.ne.s32.totalorder %s200, %s203
      %p209 = scmp.eq.s32.totalorder %s17, 0
      %p210 = por %p208, %p209
      %p211 = scmp.ne.s32.totalorder %s200, %s203
      %p212 = scmp.eq.s32.totalorder %s22, 1
      %p213 = por %p211, %p212
      %p214 = scmp.ne.s32.totalorder %s203, %s204
      %p215 = scmp.eq.s32.totalorder %s22, 0
      %p216 = por %p214, %p215
      %p217 = scmp.ne.s32.totalorder %s203, %s204
      %p218 = scmp.eq.s32.totalorder %s23, 1
      %p219 = por %p217, %p218
      %p221 = scmp.ne.s32.totalorder %s204, %s220
      %p222 = scmp.eq.s32.totalorder %s23, 0
      %p223 = por %p221, %p222
      %p224 = scmp.le.s32.totalorder 1, %s17
      %p225 = scmp.lt.s32.totalorder %s17, 3
      %p226 = pnand %p224, %p225
      %p227 = pneg %p226
      // Predicated region
      $region9: #{tpu_custom_call.1} parent=5 // pred_check
        _
      $region10: #{tpu_custom_call.1} parent=5 // pred_check_branch
        %229 = sbr.rel (%p226) target = $region12
      $region11: #{tpu_custom_call.1} parent=5 // pred_region
        %s230 = ssub.s32 %s17, 1
        // Predicated region
        $region13: #{tpu_custom_call.1} parent=11 // pred_check
          %p231 = pneg %p64
        $region14: #{tpu_custom_call.1} parent=11 // pred_check_branch
          %233 = sbr.rel (%p231) target = $region16
        $region15: #{tpu_custom_call.1} parent=11 // pred_region
          _
        $region16: #{tpu_custom_call.1} parent=11 // pred_fallthru
          _
        // Predicated region
        $region17: #{tpu_custom_call.1} parent=11 // pred_check
          %p234 = pneg %p85
        $region18: #{tpu_custom_call.1} parent=11 // pred_check_branch
          %236 = sbr.rel (%p234) target = $region20
        $region19: #{tpu_custom_call.1} parent=11 // pred_region
          _
        $region20: #{tpu_custom_call.1} parent=11 // pred_fallthru
          _
        // Predicated region
        $region21: #{tpu_custom_call.1} parent=11 // pred_check
          %p237 = pneg %p106
        $region22: #{tpu_custom_call.1} parent=11 // pred_check_branch
          %239 = sbr.rel (%p237) target = $region24
        $region23: #{tpu_custom_call.1} parent=11 // pred_region
          _
        $region24: #{tpu_custom_call.1} parent=11 // pred_fallthru
          _
        // Predicated region
        $region25: #{tpu_custom_call.1} parent=11 // pred_check
          %p240 = pneg %p127
        $region26: #{tpu_custom_call.1} parent=11 // pred_check_branch
          %242 = sbr.rel (%p240) target = $region28
        $region27: #{tpu_custom_call.1} parent=11 // pred_region
          _
        $region28: #{tpu_custom_call.1} parent=11 // pred_fallthru
          _
        // Predicated region
        $region29: #{tpu_custom_call.1} parent=11 // pred_check
          %p243 = pneg %p148
        $region30: #{tpu_custom_call.1} parent=11 // pred_check_branch
          %245 = sbr.rel (%p243) target = $region32
        $region31: #{tpu_custom_call.1} parent=11 // pred_region
          _
        $region32: #{tpu_custom_call.1} parent=11 // pred_fallthru
          _
        // Predicated region
        $region33: #{tpu_custom_call.1} parent=11 // pred_check
          %p246 = pneg %p169
        $region34: #{tpu_custom_call.1} parent=11 // pred_check_branch
          %248 = sbr.rel (%p246) target = $region36
        $region35: #{tpu_custom_call.1} parent=11 // pred_region
          _
        $region36: #{tpu_custom_call.1} parent=11 // pred_fallthru
          _
        // Predicated region
        $region37: #{tpu_custom_call.1} parent=11 // pred_check
          %p249 = pneg %p190
        $region38: #{tpu_custom_call.1} parent=11 // pred_check_branch
          %251 = sbr.rel (%p249) target = $region40
        $region39: #{tpu_custom_call.1} parent=11 // pred_region
          _
        $region40: #{tpu_custom_call.1} parent=11 // pred_fallthru
          _
      $region12: #{tpu_custom_call.1} parent=5 // pred_fallthru
        _
      %p252 = scmp.lt.s32.totalorder %s17, 2
      // Predicated region
      $region41: #{tpu_custom_call.1} parent=5 // pred_check
        %p253 = pneg %p252
      $region42: #{tpu_custom_call.1} parent=5 // pred_check_branch
        %255 = sbr.rel (%p253) target = $region44
      $region43: #{tpu_custom_call.1} parent=5 // pred_region
        // Predicated region
        $region45: #{tpu_custom_call.1} parent=43 // pred_check
          %p256 = pneg %p37
        $region46: #{tpu_custom_call.1} parent=43 // pred_check_branch
          %258 = sbr.rel (%p256) target = $region48
        $region47: #{tpu_custom_call.1} parent=43 // pred_region
          %p259 = scmp.lt.s32.totalorder %s17, 1
          %s260 = scalar_select %p259, %s17, 1
          %s261 = smul.addr %s260, 5
          %s262 = smul.addr %s261, 8
          %s263 = scalar_lea.vmem %s0, %s262
        $region48: #{tpu_custom_call.1} parent=43 // pred_fallthru
          _
      $region44: #{tpu_custom_call.1} parent=5 // pred_fallthru
        _
      %p264 = scmp.le.s32.totalorder 1, %s17
      %p265 = scmp.lt.s32.totalorder %s17, 3
      %p266 = pnand %p264, %p265
      %p267 = pneg %p266
      // Predicated region
      $region49: #{tpu_custom_call.1} parent=5 // pred_check
        _
      $region50: #{tpu_custom_call.1} parent=5 // pred_check_branch
        %269 = sbr.rel (%p266) target = $region52
      $region51: #{tpu_custom_call.1} parent=5 // pred_region
        %s270 = ssub.s32 %s17, 1
        %p271 = scmp.lt.s32.totalorder %s22, 1
        %s272 = scalar_select %p271, %s22, 1
        %s273 = smul.addr %s272, 5
        %s274 = smul.addr %s273, 8
        %s275 = scalar_lea.vmem %s0, %s274
        %p276 = pneg %p43
        %p277 = pneg %p40
        %p278 = pneg %p64
        %p279 = pneg %p61
        %p280 = pneg %p85
        %p281 = pneg %p82
        %p282 = pneg %p106
        %p283 = pneg %p103
        %p284 = pneg %p127
        %p285 = pneg %p124
        %p286 = pneg %p148
        %p287 = pneg %p145
        %p288 = pneg %p169
        %p289 = pneg %p166
        %p290 = pneg %p190
        %p291 = pneg %p187
        %p292 = pneg %p216
        %p293 = pneg %p213
        %s294 = sand.u32 %s203, 1
        %s295 = scalar_lea.sflag [#allocation3], %s294
        %s296 = sand.u32 %s203, 1
        %s297 = smul.addr %s296, 8
        %s298 = scalar_lea.vmem [#allocation2], %s297
        %p299 = scmp.lt.s32.totalorder %s22, 1
        %s300 = scalar_select %p299, %s22, 1
        %s301 = smul.addr %s300, 5
        %s302 = smul.addr %s301, 8
        %s303 = scalar_lea.vmem %s0, %s302
        %v304 = vld [vmem:[%s7] sm:$0x1]
        %v305 = vld [vmem:[%s1] sm:$0xff]
        %v306 = vld [vmem:[%s303] sm:$0xff]
        %v307 = vld [vmem:[%s303 + $0x8] sm:$0xff]
        %v308 = vld [vmem:[%s303 + $0x10] sm:$0xff]
        %v309 = vld [vmem:[%s303 + $0x18] sm:$0xff]
        %v310 = vld [vmem:[%s303 + $0x20] sm:$0xf]
        %v311 = vld [vmem:[%s2] sm:$0xff]
        %313 = vset.pattern.permute.xlu0 0
        %314 = vperm.xlu0 %313, %v311
        %v315 = vpop.permute.xlu0 %314
        %vm317 = vcmask 293888
        %v319 = vsel %vm317, %v305, 0
        %vm321 = vcmask 1043456
        %v323 = vsel %vm321, %v310, 0
        %325 = vmatprep.subr.mxu0 0.0
        %326 = vmatpush1.msra.mxu0 %v306
        %327 = vmatprep.subr.mxu0 0.0
        %328 = vmatpush1.msra.mxu0 %v307
        %329 = vmatprep.subr.mxu0 0.0
        %330 = vmatpush1.msra.mxu0 %v308
        %331 = vmatprep.subr.mxu0 0.0
        %332 = vmatpush1.msra.mxu0 %v309
        %333 = vmatprep.subr.mxu0 0.0
        %334 = vmatpush1.msra.mxu0 %v323
        %335 = vmatprep.subr.mxu0 0.0
        %336 = vmatpush1.msra.mxu0 0.0
        %337 = vmatprep.subr.mxu0 0.0
        %338 = vmatpush1.msra.mxu0 0.0
        %339 = vmatprep.subr.mxu0 0.0
        %340 = vmatpush1.msra.mxu0 0.0
        %341 = vmatprep.subr.mxu0 0.0
        %342 = vmatpush1.msra.mxu0 0.0
        %343 = vmatprep.subr.mxu0 0.0
        %344 = vmatpush1.msra.mxu0 0.0
        %345 = vmatprep.subr.mxu0 0.0
        %346 = vmatpush1.msra.mxu0 0.0
        %347 = vmatprep.subr.mxu0 0.0
        %348 = vmatpush1.msra.mxu0 0.0
        %349 = vmatprep.subr.mxu0 0.0
        %350 = vmatpush1.msra.mxu0 0.0
        %351 = vmatprep.subr.mxu0 0.0
        %352 = vmatpush1.msra.mxu0 0.0
        %353 = vmatprep.subr.mxu0 0.0
        %354 = vmatpush1.msra.mxu0 0.0
        %355 = vmatprep.subr.mxu0 0.0
        %356 = vmatpush1.msra.mxu0 0.0
        %357 = vmatprep.subr.mxu0 0.0
        %358 = vmatpush1.msra.mxu0 0.0
        %359 = vmatprep.subr.mxu0 0.0
        %360 = vmatpush1.msra.mxu0 0.0
        %361 = vmatprep.subr.mxu0 0.0
        %362 = vmatpush1.msra.mxu0 0.0
        %363 = vmatprep.subr.mxu0 0.0
        %364 = vmatpush1.msra.mxu0 0.0
        %365 = vmatprep.subr.mxu0 0.0
        %366 = vmatpush1.msra.mxu0 0.0
        %367 = vmatprep.subr.mxu0 0.0
        %368 = vmatpush1.msra.mxu0 0.0
        %369 = vmatprep.subr.mxu0 0.0
        %370 = vmatpush1.msra.mxu0 0.0
        %371 = vmatprep.subr.mxu0 0.0
        %372 = vmatpush1.msra.mxu0 0.0
        %373 = vmatprep.subr.mxu0 0.0
        %374 = vmatpush1.msra.mxu0 0.0
        %375 = vmatprep.subr.mxu0 0.0
        %376 = vmatpush1.msra.mxu0 0.0
        %377 = vmatprep.subr.mxu0 0.0
        %378 = vmatpush1.msra.mxu0 0.0
        %379 = vmatprep.subr.mxu0 0.0
        %380 = vmatpush1.msra.mxu0 0.0
        %381 = vmatprep.subr.mxu0 0.0
        %382 = vmatpush1.msra.mxu0 0.0
        %383 = vmatprep.subr.mxu0 0.0
        %384 = vmatpush1.msra.mxu0 0.0
        %385 = vmatprep.subr.mxu0 0.0
        %386 = vmatpush1.msra.mxu0 0.0
        %387 = vmatprep.subr.mxu0 0.0
        %388 = vmatpush1.msra.mxu0 0.0
        %389 = vmatprep.mubr.f32.mxu0 0.0
        %390 = vmatmul.mubr.f32.gmra.mrb[0].mxu0 %v319
        %v391 = vpop.f32.mrb[0].mxu0
        %v392 = vadd.f32 %v315, %v391
        %v393 = vpop.f32.mrb[0].mxu0
        %394 = vdwg.mxu0
        %vm395 = vcmp.gt.f32.partialorder %v392, 0.0
        %v396 = vmul.f32 %v392, 0.1
        %v397 = vsel %vm395, %v392, %v396
        %v399 = vlaneseq
        %v400 = vshrl.u32 %v399, 7
        %v401 = vsub.s32 0, %v400
        %v402 = vrot.slane %v304, %v401
        %v404 = vmul.f32 %v397, %v402
        %v405 = vld [vmem:[%s3] sm:$0xf]
        %v406 = vld [vmem:[%s4] sm:$0xf]
        %408 = vset.pattern.permute.xlu0 0
        %409 = vperm.xlu0 %408, %v406
        %v410 = vpop.permute.xlu0 %409
        %vm412 = vcmask 64512
        %v414 = vsel %vm412, %v405, 0
        %416 = vmatprep.subr.mxu0 0.0
        %417 = vmatpush1.msra.mxu0 %v404
        %418 = vmatprep.subr.mxu0 0.0
        %419 = vmatpush1.msra.mxu0 0.0
        %420 = vmatprep.subr.mxu0 0.0
        %421 = vmatpush1.msra.mxu0 0.0
        %422 = vmatprep.subr.mxu0 0.0
        %423 = vmatpush1.msra.mxu0 0.0
        %424 = vmatprep.subr.mxu0 0.0
        %425 = vmatpush1.msra.mxu0 0.0
        %426 = vmatprep.subr.mxu0 0.0
        %427 = vmatpush1.msra.mxu0 0.0
        %428 = vmatprep.subr.mxu0 0.0
        %429 = vmatpush1.msra.mxu0 0.0
        %430 = vmatprep.subr.mxu0 0.0
        %431 = vmatpush1.msra.mxu0 0.0
        %432 = vmatprep.subr.mxu0 0.0
        %433 = vmatpush1.msra.mxu0 0.0
        %434 = vmatprep.subr.mxu0 0.0
        %435 = vmatpush1.msra.mxu0 0.0
        %436 = vmatprep.subr.mxu0 0.0
        %437 = vmatpush1.msra.mxu0 0.0
        %438 = vmatprep.subr.mxu0 0.0
        %439 = vmatpush1.msra.mxu0 0.0
        %440 = vmatprep.subr.mxu0 0.0
        %441 = vmatpush1.msra.mxu0 0.0
        %442 = vmatprep.subr.mxu0 0.0
        %443 = vmatpush1.msra.mxu0 0.0
        %444 = vmatprep.subr.mxu0 0.0
        %445 = vmatpush1.msra.mxu0 0.0
        %446 = vmatprep.subr.mxu0 0.0
        %447 = vmatpush1.msra.mxu0 0.0
        %448 = vmatprep.subr.mxu0 0.0
        %449 = vmatpush1.msra.mxu0 0.0
        %450 = vmatprep.subr.mxu0 0.0
        %451 = vmatpush1.msra.mxu0 0.0
        %452 = vmatprep.subr.mxu0 0.0
        %453 = vmatpush1.msra.mxu0 0.0
        %454 = vmatprep.subr.mxu0 0.0
        %455 = vmatpush1.msra.mxu0 0.0
        %456 = vmatprep.subr.mxu0 0.0
        %457 = vmatpush1.msra.mxu0 0.0
        %458 = vmatprep.subr.mxu0 0.0
        %459 = vmatpush1.msra.mxu0 0.0
        %460 = vmatprep.subr.mxu0 0.0
        %461 = vmatpush1.msra.mxu0 0.0
        %462 = vmatprep.subr.mxu0 0.0
        %463 = vmatpush1.msra.mxu0 0.0
        %464 = vmatprep.subr.mxu0 0.0
        %465 = vmatpush1.msra.mxu0 0.0
        %466 = vmatprep.subr.mxu0 0.0
        %467 = vmatpush1.msra.mxu0 0.0
        %468 = vmatprep.subr.mxu0 0.0
        %469 = vmatpush1.msra.mxu0 0.0
        %470 = vmatprep.subr.mxu0 0.0
        %471 = vmatpush1.msra.mxu0 0.0
        %472 = vmatprep.subr.mxu0 0.0
        %473 = vmatpush1.msra.mxu0 0.0
        %474 = vmatprep.subr.mxu0 0.0
        %475 = vmatpush1.msra.mxu0 0.0
        %476 = vmatprep.subr.mxu0 0.0
        %477 = vmatpush1.msra.mxu0 0.0
        %478 = vmatprep.subr.mxu0 0.0
        %479 = vmatpush1.msra.mxu0 0.0
        %480 = vmatprep.mubr.f32.mxu0 0.0
        %481 = vmatmul.mubr.f32.gmra.mrb[0].mxu0 %v414
        %v482 = vpop.f32.mrb[0].mxu0
        %v483 = vadd.f32 %v410, %v482
        %v484 = vpop.f32.mrb[0].mxu0
        %485 = vdwg.mxu0
        %vm486 = vcmp.gt.f32.partialorder %v483, 0.0
        %v487 = vmul.f32 %v483, 0.1
        %v488 = vsel %vm486, %v483, %v487
        %v489 = vmul.f32 %v488, %v402
        %490 = vrot.lane.b32.xlu0 %v489, 11
        %v491 = vpop.permute.xlu0 %490
        %v492 = vld [vmem:[%s5] sm:$0xff]
        %493 = vrot.lane.b32.xlu0 %v489, 10
        %v494 = vpop.permute.xlu0 %493
        %s495 = scalar_lea.vmem %s5, 8
        %v496 = vld [vmem:[%s495] sm:$0xff]
        %vm497 = vcmask 31744
        %v499 = vsel %vm497, %v496, 0
        %v502 = vsel %vm321, %v494, 0
        %504 = vmatprep.subr.mxu0 0.0
        %505 = vmatpush1.msra.mxu0 %v502
        %506 = vmatprep.subr.mxu0 0.0
        %507 = vmatpush1.msra.mxu0 0.0
        %508 = vmatprep.subr.mxu0 0.0
        %509 = vmatpush1.msra.mxu0 0.0
        %510 = vmatprep.subr.mxu0 0.0
        %511 = vmatpush1.msra.mxu0 0.0
        %512 = vmatprep.subr.mxu0 0.0
        %513 = vmatpush1.msra.mxu0 0.0
        %514 = vmatprep.subr.mxu0 0.0
        %515 = vmatpush1.msra.mxu0 0.0
        %516 = vmatprep.subr.mxu0 0.0
        %517 = vmatpush1.msra.mxu0 0.0
        %518 = vmatprep.subr.mxu0 0.0
        %519 = vmatpush1.msra.mxu0 0.0
        %520 = vmatprep.subr.mxu0 0.0
        %521 = vmatpush1.msra.mxu0 0.0
        %522 = vmatprep.subr.mxu0 0.0
        %523 = vmatpush1.msra.mxu0 0.0
        %524 = vmatprep.subr.mxu0 0.0
        %525 = vmatpush1.msra.mxu0 0.0
        %526 = vmatprep.subr.mxu0 0.0
        %527 = vmatpush1.msra.mxu0 0.0
        %528 = vmatprep.subr.mxu0 0.0
        %529 = vmatpush1.msra.mxu0 0.0
        %530 = vmatprep.subr.mxu0 0.0
        %531 = vmatpush1.msra.mxu0 0.0
        %532 = vmatprep.subr.mxu0 0.0
        %533 = vmatpush1.msra.mxu0 0.0
        %534 = vmatprep.subr.mxu0 0.0
        %535 = vmatpush1.msra.mxu0 0.0
        %536 = vmatprep.subr.mxu0 0.0
        %537 = vmatpush1.msra.mxu0 0.0
        %538 = vmatprep.subr.mxu0 0.0
        %539 = vmatpush1.msra.mxu0 0.0
        %540 = vmatprep.subr.mxu0 0.0
        %541 = vmatpush1.msra.mxu0 0.0
        %542 = vmatprep.subr.mxu0 0.0
        %543 = vmatpush1.msra.mxu0 0.0
        %544 = vmatprep.subr.mxu0 0.0
        %545 = vmatpush1.msra.mxu0 0.0
        %546 = vmatprep.subr.mxu0 0.0
        %547 = vmatpush1.msra.mxu0 0.0
        %548 = vmatprep.subr.mxu0 0.0
        %549 = vmatpush1.msra.mxu0 0.0
        %550 = vmatprep.subr.mxu0 0.0
        %551 = vmatpush1.msra.mxu0 0.0
        %552 = vmatprep.subr.mxu0 0.0
        %553 = vmatpush1.msra.mxu0 0.0
        %554 = vmatprep.subr.mxu0 0.0
        %555 = vmatpush1.msra.mxu0 0.0
        %556 = vmatprep.subr.mxu0 0.0
        %557 = vmatpush1.msra.mxu0 0.0
        %558 = vmatprep.subr.mxu0 0.0
        %559 = vmatpush1.msra.mxu0 0.0
        %560 = vmatprep.subr.mxu0 0.0
        %561 = vmatpush1.msra.mxu0 0.0
        %562 = vmatprep.subr.mxu0 0.0
        %563 = vmatpush1.msra.mxu0 0.0
        %564 = vmatprep.subr.mxu0 0.0
        %565 = vmatpush1.msra.mxu0 0.0
        %566 = vmatprep.subr.mxu0 0.0
        %567 = vmatpush1.msra.mxu0 0.0
        %568 = vmatprep.mubr.f32.mxu0 0.0
        %569 = vmatmul.mubr.f32.gmra.mrb[0].mxu0 %v499
        %v570 = vpop.f32.mrb[0].mxu0
        %v571 = vadd.f32 0.0, %v570
        %v572 = vpop.f32.mrb[0].mxu0
        %573 = vdwg.mxu0
        %v575 = vsel %vm497, %v492, 0
        %v578 = vsel %vm321, %v491, 0
        %580 = vmatprep.subr.mxu0 0.0
        %581 = vmatpush1.msra.mxu0 %v578
        %582 = vmatprep.subr.mxu0 0.0
        %583 = vmatpush1.msra.mxu0 0.0
        %584 = vmatprep.subr.mxu0 0.0
        %585 = vmatpush1.msra.mxu0 0.0
        %586 = vmatprep.subr.mxu0 0.0
        %587 = vmatpush1.msra.mxu0 0.0
        %588 = vmatprep.subr.mxu0 0.0
        %589 = vmatpush1.msra.mxu0 0.0
        %590 = vmatprep.subr.mxu0 0.0
        %591 = vmatpush1.msra.mxu0 0.0
        %592 = vmatprep.subr.mxu0 0.0
        %593 = vmatpush1.msra.mxu0 0.0
        %594 = vmatprep.subr.mxu0 0.0
        %595 = vmatpush1.msra.mxu0 0.0
        %596 = vmatprep.subr.mxu0 0.0
        %597 = vmatpush1.msra.mxu0 0.0
        %598 = vmatprep.subr.mxu0 0.0
        %599 = vmatpush1.msra.mxu0 0.0
        %600 = vmatprep.subr.mxu0 0.0
        %601 = vmatpush1.msra.mxu0 0.0
        %602 = vmatprep.subr.mxu0 0.0
        %603 = vmatpush1.msra.mxu0 0.0
        %604 = vmatprep.subr.mxu0 0.0
        %605 = vmatpush1.msra.mxu0 0.0
        %606 = vmatprep.subr.mxu0 0.0
        %607 = vmatpush1.msra.mxu0 0.0
        %608 = vmatprep.subr.mxu0 0.0
        %609 = vmatpush1.msra.mxu0 0.0
        %610 = vmatprep.subr.mxu0 0.0
        %611 = vmatpush1.msra.mxu0 0.0
        %612 = vmatprep.subr.mxu0 0.0
        %613 = vmatpush1.msra.mxu0 0.0
        %614 = vmatprep.subr.mxu0 0.0
        %615 = vmatpush1.msra.mxu0 0.0
        %616 = vmatprep.subr.mxu0 0.0
        %617 = vmatpush1.msra.mxu0 0.0
        %618 = vmatprep.subr.mxu0 0.0
        %619 = vmatpush1.msra.mxu0 0.0
        %620 = vmatprep.subr.mxu0 0.0
        %621 = vmatpush1.msra.mxu0 0.0
        %622 = vmatprep.subr.mxu0 0.0
        %623 = vmatpush1.msra.mxu0 0.0
        %624 = vmatprep.subr.mxu0 0.0
        %625 = vmatpush1.msra.mxu0 0.0
        %626 = vmatprep.subr.mxu0 0.0
        %627 = vmatpush1.msra.mxu0 0.0
        %628 = vmatprep.subr.mxu0 0.0
        %629 = vmatpush1.msra.mxu0 0.0
        %630 = vmatprep.subr.mxu0 0.0
        %631 = vmatpush1.msra.mxu0 0.0
        %632 = vmatprep.subr.mxu0 0.0
        %633 = vmatpush1.msra.mxu0 0.0
        %634 = vmatprep.subr.mxu0 0.0
        %635 = vmatpush1.msra.mxu0 0.0
        %636 = vmatprep.subr.mxu0 0.0
        %637 = vmatpush1.msra.mxu0 0.0
        %638 = vmatprep.subr.mxu0 0.0
        %639 = vmatpush1.msra.mxu0 0.0
        %640 = vmatprep.subr.mxu0 0.0
        %641 = vmatpush1.msra.mxu0 0.0
        %642 = vmatprep.subr.mxu0 0.0
        %643 = vmatpush1.msra.mxu0 0.0
        %644 = vmatprep.mubr.f32.mxu0 0.0
        %645 = vmatmul.mubr.f32.gmra.mrb[0].mxu0 %v575
        %v646 = vpop.f32.mrb[0].mxu0
        %v647 = vadd.f32 %v571, %v646
        %v648 = vpop.f32.mrb[0].mxu0
        %649 = vdwg.mxu0
        %650 = vrot.lane.b32.xlu0 %v489, 9
        %v651 = vpop.permute.xlu0 %650
        %s652 = scalar_lea.vmem %s5, 16
        %v653 = vld [vmem:[%s652] sm:$0xff]
        %v655 = vsel %vm497, %v653, 0
        %v658 = vsel %vm321, %v651, 0
        %660 = vmatprep.subr.mxu0 0.0
        %661 = vmatpush1.msra.mxu0 %v658
        %662 = vmatprep.subr.mxu0 0.0
        %663 = vmatpush1.msra.mxu0 0.0
        %664 = vmatprep.subr.mxu0 0.0
        %665 = vmatpush1.msra.mxu0 0.0
        %666 = vmatprep.subr.mxu0 0.0
        %667 = vmatpush1.msra.mxu0 0.0
        %668 = vmatprep.subr.mxu0 0.0
        %669 = vmatpush1.msra.mxu0 0.0
        %670 = vmatprep.subr.mxu0 0.0
        %671 = vmatpush1.msra.mxu0 0.0
        %672 = vmatprep.subr.mxu0 0.0
        %673 = vmatpush1.msra.mxu0 0.0
        %674 = vmatprep.subr.mxu0 0.0
        %675 = vmatpush1.msra.mxu0 0.0
        %676 = vmatprep.subr.mxu0 0.0
        %677 = vmatpush1.msra.mxu0 0.0
        %678 = vmatprep.subr.mxu0 0.0
        %679 = vmatpush1.msra.mxu0 0.0
        %680 = vmatprep.subr.mxu0 0.0
        %681 = vmatpush1.msra.mxu0 0.0
        %682 = vmatprep.subr.mxu0 0.0
        %683 = vmatpush1.msra.mxu0 0.0
        %684 = vmatprep.subr.mxu0 0.0
        %685 = vmatpush1.msra.mxu0 0.0
        %686 = vmatprep.subr.mxu0 0.0
        %687 = vmatpush1.msra.mxu0 0.0
        %688 = vmatprep.subr.mxu0 0.0
        %689 = vmatpush1.msra.mxu0 0.0
        %690 = vmatprep.subr.mxu0 0.0
        %691 = vmatpush1.msra.mxu0 0.0
        %692 = vmatprep.subr.mxu0 0.0
        %693 = vmatpush1.msra.mxu0 0.0
        %694 = vmatprep.subr.mxu0 0.0
        %695 = vmatpush1.msra.mxu0 0.0
        %696 = vmatprep.subr.mxu0 0.0
        %697 = vmatpush1.msra.mxu0 0.0
        %698 = vmatprep.subr.mxu0 0.0
        %699 = vmatpush1.msra.mxu0 0.0
        %700 = vmatprep.subr.mxu0 0.0
        %701 = vmatpush1.msra.mxu0 0.0
        %702 = vmatprep.subr.mxu0 0.0
        %703 = vmatpush1.msra.mxu0 0.0
        %704 = vmatprep.subr.mxu0 0.0
        %705 = vmatpush1.msra.mxu0 0.0
        %706 = vmatprep.subr.mxu0 0.0
        %707 = vmatpush1.msra.mxu0 0.0
        %708 = vmatprep.subr.mxu0 0.0
        %709 = vmatpush1.msra.mxu0 0.0
        %710 = vmatprep.subr.mxu0 0.0
        %711 = vmatpush1.msra.mxu0 0.0
        %712 = vmatprep.subr.mxu0 0.0
        %713 = vmatpush1.msra.mxu0 0.0
        %714 = vmatprep.subr.mxu0 0.0
        %715 = vmatpush1.msra.mxu0 0.0
        %716 = vmatprep.subr.mxu0 0.0
        %717 = vmatpush1.msra.mxu0 0.0
        %718 = vmatprep.subr.mxu0 0.0
        %719 = vmatpush1.msra.mxu0 0.0
        %720 = vmatprep.subr.mxu0 0.0
        %721 = vmatpush1.msra.mxu0 0.0
        %722 = vmatprep.subr.mxu0 0.0
        %723 = vmatpush1.msra.mxu0 0.0
        %724 = vmatprep.mubr.f32.mxu0 0.0
        %725 = vmatmul.mubr.f32.gmra.mrb[0].mxu0 %v655
        %v726 = vpop.f32.mrb[0].mxu0
        %v727 = vadd.f32 0.0, %v726
        %v728 = vpop.f32.mrb[0].mxu0
        %729 = vdwg.mxu0
        %v730 = vadd.f32 %v647, %v727
        %731 = vrot.lane.b32.xlu0 %v489, 1
        %v732 = vpop.permute.xlu0 %731
        %s733 = scalar_lea.vmem %s5, 24
        %v734 = vld [vmem:[%s733] sm:$0xff]
        %v736 = vsel %vm497, %v734, 0
        %v739 = vsel %vm321, %v732, 0
        %741 = vmatprep.subr.mxu0 0.0
        %742 = vmatpush1.msra.mxu0 %v739
        %743 = vmatprep.subr.mxu0 0.0
        %744 = vmatpush1.msra.mxu0 0.0
        %745 = vmatprep.subr.mxu0 0.0
        %746 = vmatpush1.msra.mxu0 0.0
        %747 = vmatprep.subr.mxu0 0.0
        %748 = vmatpush1.msra.mxu0 0.0
        %749 = vmatprep.subr.mxu0 0.0
        %750 = vmatpush1.msra.mxu0 0.0
        %751 = vmatprep.subr.mxu0 0.0
        %752 = vmatpush1.msra.mxu0 0.0
        %753 = vmatprep.subr.mxu0 0.0
        %754 = vmatpush1.msra.mxu0 0.0
        %755 = vmatprep.subr.mxu0 0.0
        %756 = vmatpush1.msra.mxu0 0.0
        %757 = vmatprep.subr.mxu0 0.0
        %758 = vmatpush1.msra.mxu0 0.0
        %759 = vmatprep.subr.mxu0 0.0
        %760 = vmatpush1.msra.mxu0 0.0
        %761 = vmatprep.subr.mxu0 0.0
        %762 = vmatpush1.msra.mxu0 0.0
        %763 = vmatprep.subr.mxu0 0.0
        %764 = vmatpush1.msra.mxu0 0.0
        %765 = vmatprep.subr.mxu0 0.0
        %766 = vmatpush1.msra.mxu0 0.0
        %767 = vmatprep.subr.mxu0 0.0
        %768 = vmatpush1.msra.mxu0 0.0
        %769 = vmatprep.subr.mxu0 0.0
        %770 = vmatpush1.msra.mxu0 0.0
        %771 = vmatprep.subr.mxu0 0.0
        %772 = vmatpush1.msra.mxu0 0.0
        %773 = vmatprep.subr.mxu0 0.0
        %774 = vmatpush1.msra.mxu0 0.0
        %775 = vmatprep.subr.mxu0 0.0
        %776 = vmatpush1.msra.mxu0 0.0
        %777 = vmatprep.subr.mxu0 0.0
        %778 = vmatpush1.msra.mxu0 0.0
        %779 = vmatprep.subr.mxu0 0.0
        %780 = vmatpush1.msra.mxu0 0.0
        %781 = vmatprep.subr.mxu0 0.0
        %782 = vmatpush1.msra.mxu0 0.0
        %783 = vmatprep.subr.mxu0 0.0
        %784 = vmatpush1.msra.mxu0 0.0
        %785 = vmatprep.subr.mxu0 0.0
        %786 = vmatpush1.msra.mxu0 0.0
        %787 = vmatprep.subr.mxu0 0.0
        %788 = vmatpush1.msra.mxu0 0.0
        %789 = vmatprep.subr.mxu0 0.0
        %790 = vmatpush1.msra.mxu0 0.0
        %791 = vmatprep.subr.mxu0 0.0
        %792 = vmatpush1.msra.mxu0 0.0
        %793 = vmatprep.subr.mxu0 0.0
        %794 = vmatpush1.msra.mxu0 0.0
        %795 = vmatprep.subr.mxu0 0.0
        %796 = vmatpush1.msra.mxu0 0.0
        %797 = vmatprep.subr.mxu0 0.0
        %798 = vmatpush1.msra.mxu0 0.0
        %799 = vmatprep.subr.mxu0 0.0
        %800 = vmatpush1.msra.mxu0 0.0
        %801 = vmatprep.subr.mxu0 0.0
        %802 = vmatpush1.msra.mxu0 0.0
        %803 = vmatprep.subr.mxu0 0.0
        %804 = vmatpush1.msra.mxu0 0.0
        %805 = vmatprep.mubr.f32.mxu0 0.0
        %806 = vmatmul.mubr.f32.gmra.mrb[0].mxu0 %v736
        %v807 = vpop.f32.mrb[0].mxu0
        %v808 = vadd.f32 0.0, %v807
        %v809 = vpop.f32.mrb[0].mxu0
        %810 = vdwg.mxu0
        %v811 = vadd.f32 %v730, %v808
        %s812 = scalar_lea.vmem %s5, 32
        %v813 = vld [vmem:[%s812] sm:$0xff]
        %v815 = vsel %vm497, %v813, 0
        %v818 = vsel %vm321, %v489, 0
        %820 = vmatprep.subr.mxu0 0.0
        %821 = vmatpush1.msra.mxu0 %v818
        %822 = vmatprep.subr.mxu0 0.0
        %823 = vmatpush1.msra.mxu0 0.0
        %824 = vmatprep.subr.mxu0 0.0
        %825 = vmatpush1.msra.mxu0 0.0
        %826 = vmatprep.subr.mxu0 0.0
        %827 = vmatpush1.msra.mxu0 0.0
        %828 = vmatprep.subr.mxu0 0.0
        %829 = vmatpush1.msra.mxu0 0.0
        %830 = vmatprep.subr.mxu0 0.0
        %831 = vmatpush1.msra.mxu0 0.0
        %832 = vmatprep.subr.mxu0 0.0
        %833 = vmatpush1.msra.mxu0 0.0
        %834 = vmatprep.subr.mxu0 0.0
        %835 = vmatpush1.msra.mxu0 0.0
        %836 = vmatprep.subr.mxu0 0.0
        %837 = vmatpush1.msra.mxu0 0.0
        %838 = vmatprep.subr.mxu0 0.0
        %839 = vmatpush1.msra.mxu0 0.0
        %840 = vmatprep.subr.mxu0 0.0
        %841 = vmatpush1.msra.mxu0 0.0
        %842 = vmatprep.subr.mxu0 0.0
        %843 = vmatpush1.msra.mxu0 0.0
        %844 = vmatprep.subr.mxu0 0.0
        %845 = vmatpush1.msra.mxu0 0.0
        %846 = vmatprep.subr.mxu0 0.0
        %847 = vmatpush1.msra.mxu0 0.0
        %848 = vmatprep.subr.mxu0 0.0
        %849 = vmatpush1.msra.mxu0 0.0
        %850 = vmatprep.subr.mxu0 0.0
        %851 = vmatpush1.msra.mxu0 0.0
        %852 = vmatprep.subr.mxu0 0.0
        %853 = vmatpush1.msra.mxu0 0.0
        %854 = vmatprep.subr.mxu0 0.0
        %855 = vmatpush1.msra.mxu0 0.0
        %856 = vmatprep.subr.mxu0 0.0
        %857 = vmatpush1.msra.mxu0 0.0
        %858 = vmatprep.subr.mxu0 0.0
        %859 = vmatpush1.msra.mxu0 0.0
        %860 = vmatprep.subr.mxu0 0.0
        %861 = vmatpush1.msra.mxu0 0.0
        %862 = vmatprep.subr.mxu0 0.0
        %863 = vmatpush1.msra.mxu0 0.0
        %864 = vmatprep.subr.mxu0 0.0
        %865 = vmatpush1.msra.mxu0 0.0
        %866 = vmatprep.subr.mxu0 0.0
        %867 = vmatpush1.msra.mxu0 0.0
        %868 = vmatprep.subr.mxu0 0.0
        %869 = vmatpush1.msra.mxu0 0.0
        %870 = vmatprep.subr.mxu0 0.0
        %871 = vmatpush1.msra.mxu0 0.0
        %872 = vmatprep.subr.mxu0 0.0
        %873 = vmatpush1.msra.mxu0 0.0
        %874 = vmatprep.subr.mxu0 0.0
        %875 = vmatpush1.msra.mxu0 0.0
        %876 = vmatprep.subr.mxu0 0.0
        %877 = vmatpush1.msra.mxu0 0.0
        %878 = vmatprep.subr.mxu0 0.0
        %879 = vmatpush1.msra.mxu0 0.0
        %880 = vmatprep.subr.mxu0 0.0
        %881 = vmatpush1.msra.mxu0 0.0
        %882 = vmatprep.subr.mxu0 0.0
        %883 = vmatpush1.msra.mxu0 0.0
        %884 = vmatprep.mubr.f32.mxu0 0.0
        %885 = vmatmul.mubr.f32.gmra.mrb[0].mxu0 %v815
        %v886 = vpop.f32.mrb[0].mxu0
        %v887 = vadd.f32 0.0, %v886
        %v888 = vpop.f32.mrb[0].mxu0
        %889 = vdwg.mxu0
        %v890 = vadd.f32 %v811, %v887
        %891 = vrot.lane.b32.xlu0 %v489, 127
        %v892 = vpop.permute.xlu0 %891
        %s893 = scalar_lea.vmem %s5, 40
        %v894 = vld [vmem:[%s893] sm:$0xff]
        %v896 = vsel %vm497, %v894, 0
        %v899 = vsel %vm321, %v892, 0
        %901 = vmatprep.subr.mxu0 0.0
        %902 = vmatpush1.msra.mxu0 %v899
        %903 = vmatprep.subr.mxu0 0.0
        %904 = vmatpush1.msra.mxu0 0.0
        %905 = vmatprep.subr.mxu0 0.0
        %906 = vmatpush1.msra.mxu0 0.0
        %907 = vmatprep.subr.mxu0 0.0
        %908 = vmatpush1.msra.mxu0 0.0
        %909 = vmatprep.subr.mxu0 0.0
        %910 = vmatpush1.msra.mxu0 0.0
        %911 = vmatprep.subr.mxu0 0.0
        %912 = vmatpush1.msra.mxu0 0.0
        %913 = vmatprep.subr.mxu0 0.0
        %914 = vmatpush1.msra.mxu0 0.0
        %915 = vmatprep.subr.mxu0 0.0
        %916 = vmatpush1.msra.mxu0 0.0
        %917 = vmatprep.subr.mxu0 0.0
        %918 = vmatpush1.msra.mxu0 0.0
        %919 = vmatprep.subr.mxu0 0.0
        %920 = vmatpush1.msra.mxu0 0.0
        %921 = vmatprep.subr.mxu0 0.0
        %922 = vmatpush1.msra.mxu0 0.0
        %923 = vmatprep.subr.mxu0 0.0
        %924 = vmatpush1.msra.mxu0 0.0
        %925 = vmatprep.subr.mxu0 0.0
        %926 = vmatpush1.msra.mxu0 0.0
        %927 = vmatprep.subr.mxu0 0.0
        %928 = vmatpush1.msra.mxu0 0.0
        %929 = vmatprep.subr.mxu0 0.0
        %930 = vmatpush1.msra.mxu0 0.0
        %931 = vmatprep.subr.mxu0 0.0
        %932 = vmatpush1.msra.mxu0 0.0
        %933 = vmatprep.subr.mxu0 0.0
        %934 = vmatpush1.msra.mxu0 0.0
        %935 = vmatprep.subr.mxu0 0.0
        %936 = vmatpush1.msra.mxu0 0.0
        %937 = vmatprep.subr.mxu0 0.0
        %938 = vmatpush1.msra.mxu0 0.0
        %939 = vmatprep.subr.mxu0 0.0
        %940 = vmatpush1.msra.mxu0 0.0
        %941 = vmatprep.subr.mxu0 0.0
        %942 = vmatpush1.msra.mxu0 0.0
        %943 = vmatprep.subr.mxu0 0.0
        %944 = vmatpush1.msra.mxu0 0.0
        %945 = vmatprep.subr.mxu0 0.0
        %946 = vmatpush1.msra.mxu0 0.0
        %947 = vmatprep.subr.mxu0 0.0
        %948 = vmatpush1.msra.mxu0 0.0
        %949 = vmatprep.subr.mxu0 0.0
        %950 = vmatpush1.msra.mxu0 0.0
        %951 = vmatprep.subr.mxu0 0.0
        %952 = vmatpush1.msra.mxu0 0.0
        %953 = vmatprep.subr.mxu0 0.0
        %954 = vmatpush1.msra.mxu0 0.0
        %955 = vmatprep.subr.mxu0 0.0
        %956 = vmatpush1.msra.mxu0 0.0
        %957 = vmatprep.subr.mxu0 0.0
        %958 = vmatpush1.msra.mxu0 0.0
        %959 = vmatprep.subr.mxu0 0.0
        %960 = vmatpush1.msra.mxu0 0.0
        %961 = vmatprep.subr.mxu0 0.0
        %962 = vmatpush1.msra.mxu0 0.0
        %963 = vmatprep.subr.mxu0 0.0
        %964 = vmatpush1.msra.mxu0 0.0
        %965 = vmatprep.mubr.f32.mxu0 0.0
        %966 = vmatmul.mubr.f32.gmra.mrb[0].mxu0 %v896
        %v967 = vpop.f32.mrb[0].mxu0
        %v968 = vadd.f32 0.0, %v967
        %v969 = vpop.f32.mrb[0].mxu0
        %970 = vdwg.mxu0
        %v971 = vadd.f32 %v890, %v968
        %972 = vrot.lane.b32.xlu0 %v489, 119
        %v973 = vpop.permute.xlu0 %972
        %s974 = scalar_lea.vmem %s5, 48
        %v975 = vld [vmem:[%s974] sm:$0xff]
        %v977 = vsel %vm497, %v975, 0
        %v980 = vsel %vm321, %v973, 0
        %982 = vmatprep.subr.mxu0 0.0
        %983 = vmatpush1.msra.mxu0 %v980
        %984 = vmatprep.subr.mxu0 0.0
        %985 = vmatpush1.msra.mxu0 0.0
        %986 = vmatprep.subr.mxu0 0.0
        %987 = vmatpush1.msra.mxu0 0.0
        %988 = vmatprep.subr.mxu0 0.0
        %989 = vmatpush1.msra.mxu0 0.0
        %990 = vmatprep.subr.mxu0 0.0
        %991 = vmatpush1.msra.mxu0 0.0
        %992 = vmatprep.subr.mxu0 0.0
        %993 = vmatpush1.msra.mxu0 0.0
        %994 = vmatprep.subr.mxu0 0.0
        %995 = vmatpush1.msra.mxu0 0.0
        %996 = vmatprep.subr.mxu0 0.0
        %997 = vmatpush1.msra.mxu0 0.0
        %998 = vmatprep.subr.mxu0 0.0
        %999 = vmatpush1.msra.mxu0 0.0
        %1000 = vmatprep.subr.mxu0 0.0
        %1001 = vmatpush1.msra.mxu0 0.0
        %1002 = vmatprep.subr.mxu0 0.0
        %1003 = vmatpush1.msra.mxu0 0.0
        %1004 = vmatprep.subr.mxu0 0.0
        %1005 = vmatpush1.msra.mxu0 0.0
        %1006 = vmatprep.subr.mxu0 0.0
        %1007 = vmatpush1.msra.mxu0 0.0
        %1008 = vmatprep.subr.mxu0 0.0
        %1009 = vmatpush1.msra.mxu0 0.0
        %1010 = vmatprep.subr.mxu0 0.0
        %1011 = vmatpush1.msra.mxu0 0.0
        %1012 = vmatprep.subr.mxu0 0.0
        %1013 = vmatpush1.msra.mxu0 0.0
        %1014 = vmatprep.subr.mxu0 0.0
        %1015 = vmatpush1.msra.mxu0 0.0
        %1016 = vmatprep.subr.mxu0 0.0
        %1017 = vmatpush1.msra.mxu0 0.0
        %1018 = vmatprep.subr.mxu0 0.0
        %1019 = vmatpush1.msra.mxu0 0.0
        %1020 = vmatprep.subr.mxu0 0.0
        %1021 = vmatpush1.msra.mxu0 0.0
        %1022 = vmatprep.subr.mxu0 0.0
        %1023 = vmatpush1.msra.mxu0 0.0
        %1024 = vmatprep.subr.mxu0 0.0
        %1025 = vmatpush1.msra.mxu0 0.0
        %1026 = vmatprep.subr.mxu0 0.0
        %1027 = vmatpush1.msra.mxu0 0.0
        %1028 = vmatprep.subr.mxu0 0.0
        %1029 = vmatpush1.msra.mxu0 0.0
        %1030 = vmatprep.subr.mxu0 0.0
        %1031 = vmatpush1.msra.mxu0 0.0
        %1032 = vmatprep.subr.mxu0 0.0
        %1033 = vmatpush1.msra.mxu0 0.0
        %1034 = vmatprep.subr.mxu0 0.0
        %1035 = vmatpush1.msra.mxu0 0.0
        %1036 = vmatprep.subr.mxu0 0.0
        %1037 = vmatpush1.msra.mxu0 0.0
        %1038 = vmatprep.subr.mxu0 0.0
        %1039 = vmatpush1.msra.mxu0 0.0
        %1040 = vmatprep.subr.mxu0 0.0
        %1041 = vmatpush1.msra.mxu0 0.0
        %1042 = vmatprep.subr.mxu0 0.0
        %1043 = vmatpush1.msra.mxu0 0.0
        %1044 = vmatprep.subr.mxu0 0.0
        %1045 = vmatpush1.msra.mxu0 0.0
        %1046 = vmatprep.mubr.f32.mxu0 0.0
        %1047 = vmatmul.mubr.f32.gmra.mrb[0].mxu0 %v977
        %v1048 = vpop.f32.mrb[0].mxu0
        %v1049 = vadd.f32 0.0, %v1048
        %v1050 = vpop.f32.mrb[0].mxu0
        %1051 = vdwg.mxu0
        %v1052 = vadd.f32 %v971, %v1049
        %1053 = vrot.lane.b32.xlu0 %v489, 118
        %v1054 = vpop.permute.xlu0 %1053
        %s1055 = scalar_lea.vmem %s5, 56
        %v1056 = vld [vmem:[%s1055] sm:$0xff]
        %v1058 = vsel %vm497, %v1056, 0
        %v1061 = vsel %vm321, %v1054, 0
        %1063 = vmatprep.subr.mxu0 0.0
        %1064 = vmatpush1.msra.mxu0 %v1061
        %1065 = vmatprep.subr.mxu0 0.0
        %1066 = vmatpush1.msra.mxu0 0.0
        %1067 = vmatprep.subr.mxu0 0.0
        %1068 = vmatpush1.msra.mxu0 0.0
        %1069 = vmatprep.subr.mxu0 0.0
        %1070 = vmatpush1.msra.mxu0 0.0
        %1071 = vmatprep.subr.mxu0 0.0
        %1072 = vmatpush1.msra.mxu0 0.0
        %1073 = vmatprep.subr.mxu0 0.0
        %1074 = vmatpush1.msra.mxu0 0.0
        %1075 = vmatprep.subr.mxu0 0.0
        %1076 = vmatpush1.msra.mxu0 0.0
        %1077 = vmatprep.subr.mxu0 0.0
        %1078 = vmatpush1.msra.mxu0 0.0
        %1079 = vmatprep.subr.mxu0 0.0
        %1080 = vmatpush1.msra.mxu0 0.0
        %1081 = vmatprep.subr.mxu0 0.0
        %1082 = vmatpush1.msra.mxu0 0.0
        %1083 = vmatprep.subr.mxu0 0.0
        %1084 = vmatpush1.msra.mxu0 0.0
        %1085 = vmatprep.subr.mxu0 0.0
        %1086 = vmatpush1.msra.mxu0 0.0
        %1087 = vmatprep.subr.mxu0 0.0
        %1088 = vmatpush1.msra.mxu0 0.0
        %1089 = vmatprep.subr.mxu0 0.0
        %1090 = vmatpush1.msra.mxu0 0.0
        %1091 = vmatprep.subr.mxu0 0.0
        %1092 = vmatpush1.msra.mxu0 0.0
        %1093 = vmatprep.subr.mxu0 0.0
        %1094 = vmatpush1.msra.mxu0 0.0
        %1095 = vmatprep.subr.mxu0 0.0
        %1096 = vmatpush1.msra.mxu0 0.0
        %1097 = vmatprep.subr.mxu0 0.0
        %1098 = vmatpush1.msra.mxu0 0.0
        %1099 = vmatprep.subr.mxu0 0.0
        %1100 = vmatpush1.msra.mxu0 0.0
        %1101 = vmatprep.subr.mxu0 0.0
        %1102 = vmatpush1.msra.mxu0 0.0
        %1103 = vmatprep.subr.mxu0 0.0
        %1104 = vmatpush1.msra.mxu0 0.0
        %1105 = vmatprep.subr.mxu0 0.0
        %1106 = vmatpush1.msra.mxu0 0.0
        %1107 = vmatprep.subr.mxu0 0.0
        %1108 = vmatpush1.msra.mxu0 0.0
        %1109 = vmatprep.subr.mxu0 0.0
        %1110 = vmatpush1.msra.mxu0 0.0
        %1111 = vmatprep.subr.mxu0 0.0
        %1112 = vmatpush1.msra.mxu0 0.0
        %1113 = vmatprep.subr.mxu0 0.0
        %1114 = vmatpush1.msra.mxu0 0.0
        %1115 = vmatprep.subr.mxu0 0.0
        %1116 = vmatpush1.msra.mxu0 0.0
        %1117 = vmatprep.subr.mxu0 0.0
        %1118 = vmatpush1.msra.mxu0 0.0
        %1119 = vmatprep.subr.mxu0 0.0
        %1120 = vmatpush1.msra.mxu0 0.0
        %1121 = vmatprep.subr.mxu0 0.0
        %1122 = vmatpush1.msra.mxu0 0.0
        %1123 = vmatprep.subr.mxu0 0.0
        %1124 = vmatpush1.msra.mxu0 0.0
        %1125 = vmatprep.subr.mxu0 0.0
        %1126 = vmatpush1.msra.mxu0 0.0
        %1127 = vmatprep.mubr.f32.mxu0 0.0
        %1128 = vmatmul.mubr.f32.gmra.mrb[0].mxu0 %v1058
        %v1129 = vpop.f32.mrb[0].mxu0
        %v1130 = vadd.f32 0.0, %v1129
        %v1131 = vpop.f32.mrb[0].mxu0
        %1132 = vdwg.mxu0
        %v1133 = vadd.f32 %v1052, %v1130
        %1134 = vrot.lane.b32.xlu0 %v489, 117
        %v1135 = vpop.permute.xlu0 %1134
        %s1136 = scalar_lea.vmem %s5, 64
        %v1137 = vld [vmem:[%s1136] sm:$0xff]
        %v1139 = vsel %vm497, %v1137, 0
        %v1142 = vsel %vm321, %v1135, 0
        %1144 = vmatprep.subr.mxu0 0.0
        %1145 = vmatpush1.msra.mxu0 %v1142
        %1146 = vmatprep.subr.mxu0 0.0
        %1147 = vmatpush1.msra.mxu0 0.0
        %1148 = vmatprep.subr.mxu0 0.0
        %1149 = vmatpush1.msra.mxu0 0.0
        %1150 = vmatprep.subr.mxu0 0.0
        %1151 = vmatpush1.msra.mxu0 0.0
        %1152 = vmatprep.subr.mxu0 0.0
        %1153 = vmatpush1.msra.mxu0 0.0
        %1154 = vmatprep.subr.mxu0 0.0
        %1155 = vmatpush1.msra.mxu0 0.0
        %1156 = vmatprep.subr.mxu0 0.0
        %1157 = vmatpush1.msra.mxu0 0.0
        %1158 = vmatprep.subr.mxu0 0.0
        %1159 = vmatpush1.msra.mxu0 0.0
        %1160 = vmatprep.subr.mxu0 0.0
        %1161 = vmatpush1.msra.mxu0 0.0
        %1162 = vmatprep.subr.mxu0 0.0
        %1163 = vmatpush1.msra.mxu0 0.0
        %1164 = vmatprep.subr.mxu0 0.0
        %1165 = vmatpush1.msra.mxu0 0.0
        %1166 = vmatprep.subr.mxu0 0.0
        %1167 = vmatpush1.msra.mxu0 0.0
        %1168 = vmatprep.subr.mxu0 0.0
        %1169 = vmatpush1.msra.mxu0 0.0
        %1170 = vmatprep.subr.mxu0 0.0
        %1171 = vmatpush1.msra.mxu0 0.0
        %1172 = vmatprep.subr.mxu0 0.0
        %1173 = vmatpush1.msra.mxu0 0.0
        %1174 = vmatprep.subr.mxu0 0.0
        %1175 = vmatpush1.msra.mxu0 0.0
        %1176 = vmatprep.subr.mxu0 0.0
        %1177 = vmatpush1.msra.mxu0 0.0
        %1178 = vmatprep.subr.mxu0 0.0
        %1179 = vmatpush1.msra.mxu0 0.0
        %1180 = vmatprep.subr.mxu0 0.0
        %1181 = vmatpush1.msra.mxu0 0.0
        %1182 = vmatprep.subr.mxu0 0.0
        %1183 = vmatpush1.msra.mxu0 0.0
        %1184 = vmatprep.subr.mxu0 0.0
        %1185 = vmatpush1.msra.mxu0 0.0
        %1186 = vmatprep.subr.mxu0 0.0
        %1187 = vmatpush1.msra.mxu0 0.0
        %1188 = vmatprep.subr.mxu0 0.0
        %1189 = vmatpush1.msra.mxu0 0.0
        %1190 = vmatprep.subr.mxu0 0.0
        %1191 = vmatpush1.msra.mxu0 0.0
        %1192 = vmatprep.subr.mxu0 0.0
        %1193 = vmatpush1.msra.mxu0 0.0
        %1194 = vmatprep.subr.mxu0 0.0
        %1195 = vmatpush1.msra.mxu0 0.0
        %1196 = vmatprep.subr.mxu0 0.0
        %1197 = vmatpush1.msra.mxu0 0.0
        %1198 = vmatprep.subr.mxu0 0.0
        %1199 = vmatpush1.msra.mxu0 0.0
        %1200 = vmatprep.subr.mxu0 0.0
        %1201 = vmatpush1.msra.mxu0 0.0
        %1202 = vmatprep.subr.mxu0 0.0
        %1203 = vmatpush1.msra.mxu0 0.0
        %1204 = vmatprep.subr.mxu0 0.0
        %1205 = vmatpush1.msra.mxu0 0.0
        %1206 = vmatprep.subr.mxu0 0.0
        %1207 = vmatpush1.msra.mxu0 0.0
        %1208 = vmatprep.mubr.f32.mxu0 0.0
        %1209 = vmatmul.mubr.f32.gmra.mrb[0].mxu0 %v1139
        %v1210 = vpop.f32.mrb[0].mxu0
        %v1211 = vadd.f32 0.0, %v1210
        %v1212 = vpop.f32.mrb[0].mxu0
        %1213 = vdwg.mxu0
        %v1214 = vadd.f32 %v1133, %v1211
        %v1215 = vld [vmem:[%s6] sm:$0xff]
        %1217 = vset.pattern.permute.xlu0 0
        %1218 = vperm.xlu0 %1217, %v1215
        %v1219 = vpop.permute.xlu0 %1218
        %v1221 = vadd.f32 %v1214, %v1219
        %vm1222 = vcmp.gt.f32.partialorder %v1221, 0.0
        %v1223 = vmul.f32 %v1221, 0.1
        %v1224 = vsel %vm1222, %v1221, %v1223
        %v1225 = vmul.f32 %v1224, %v402
        %v1226 = vadd.f32 %v404, %v1225
        %s1227 = scalar_lea.vmem %s3, 4
        %v1228 = vld [vmem:[%s1227] sm:$0xf]
        %s1229 = scalar_lea.vmem %s4, 4
        %v1230 = vld [vmem:[%s1229] sm:$0xf]
        %1232 = vset.pattern.permute.xlu0 0
        %1233 = vperm.xlu0 %1232, %v1230
        %v1234 = vpop.permute.xlu0 %1233
        %v1237 = vsel %vm412, %v1228, 0
        %1239 = vmatprep.subr.mxu0 0.0
        %1240 = vmatpush1.msra.mxu0 %v1226
        %1241 = vmatprep.subr.mxu0 0.0
        %1242 = vmatpush1.msra.mxu0 0.0
        %1243 = vmatprep.subr.mxu0 0.0
        %1244 = vmatpush1.msra.mxu0 0.0
        %1245 = vmatprep.subr.mxu0 0.0
        %1246 = vmatpush1.msra.mxu0 0.0
        %1247 = vmatprep.subr.mxu0 0.0
        %1248 = vmatpush1.msra.mxu0 0.0
        %1249 = vmatprep.subr.mxu0 0.0
        %1250 = vmatpush1.msra.mxu0 0.0
        %1251 = vmatprep.subr.mxu0 0.0
        %1252 = vmatpush1.msra.mxu0 0.0
        %1253 = vmatprep.subr.mxu0 0.0
        %1254 = vmatpush1.msra.mxu0 0.0
        %1255 = vmatprep.subr.mxu0 0.0
        %1256 = vmatpush1.msra.mxu0 0.0
        %1257 = vmatprep.subr.mxu0 0.0
        %1258 = vmatpush1.msra.mxu0 0.0
        %1259 = vmatprep.subr.mxu0 0.0
        %1260 = vmatpush1.msra.mxu0 0.0
        %1261 = vmatprep.subr.mxu0 0.0
        %1262 = vmatpush1.msra.mxu0 0.0
        %1263 = vmatprep.subr.mxu0 0.0
        %1264 = vmatpush1.msra.mxu0 0.0
        %1265 = vmatprep.subr.mxu0 0.0
        %1266 = vmatpush1.msra.mxu0 0.0
        %1267 = vmatprep.subr.mxu0 0.0
        %1268 = vmatpush1.msra.mxu0 0.0
        %1269 = vmatprep.subr.mxu0 0.0
        %1270 = vmatpush1.msra.mxu0 0.0
        %1271 = vmatprep.subr.mxu0 0.0
        %1272 = vmatpush1.msra.mxu0 0.0
        %1273 = vmatprep.subr.mxu0 0.0
        %1274 = vmatpush1.msra.mxu0 0.0
        %1275 = vmatprep.subr.mxu0 0.0
        %1276 = vmatpush1.msra.mxu0 0.0
        %1277 = vmatprep.subr.mxu0 0.0
        %1278 = vmatpush1.msra.mxu0 0.0
        %1279 = vmatprep.subr.mxu0 0.0
        %1280 = vmatpush1.msra.mxu0 0.0
        %1281 = vmatprep.subr.mxu0 0.0
        %1282 = vmatpush1.msra.mxu0 0.0
        %1283 = vmatprep.subr.mxu0 0.0
        %1284 = vmatpush1.msra.mxu0 0.0
        %1285 = vmatprep.subr.mxu0 0.0
        %1286 = vmatpush1.msra.mxu0 0.0
        %1287 = vmatprep.subr.mxu0 0.0
        %1288 = vmatpush1.msra.mxu0 0.0
        %1289 = vmatprep.subr.mxu0 0.0
        %1290 = vmatpush1.msra.mxu0 0.0
        %1291 = vmatprep.subr.mxu0 0.0
        %1292 = vmatpush1.msra.mxu0 0.0
        %1293 = vmatprep.subr.mxu0 0.0
        %1294 = vmatpush1.msra.mxu0 0.0
        %1295 = vmatprep.subr.mxu0 0.0
        %1296 = vmatpush1.msra.mxu0 0.0
        %1297 = vmatprep.subr.mxu0 0.0
        %1298 = vmatpush1.msra.mxu0 0.0
        %1299 = vmatprep.subr.mxu0 0.0
        %1300 = vmatpush1.msra.mxu0 0.0
        %1301 = vmatprep.subr.mxu0 0.0
        %1302 = vmatpush1.msra.mxu0 0.0
        %1303 = vmatprep.mubr.f32.mxu0 0.0
        %1304 = vmatmul.mubr.f32.gmra.mrb[0].mxu0 %v1237
        %v1305 = vpop.f32.mrb[0].mxu0
        %v1306 = vadd.f32 %v1234, %v1305
        %v1307 = vpop.f32.mrb[0].mxu0
        %1308 = vdwg.mxu0
        %vm1309 = vcmp.gt.f32.partialorder %v1306, 0.0
        %v1310 = vmul.f32 %v1306, 0.1
        %v1311 = vsel %vm1309, %v1306, %v1310
        %v1312 = vmul.f32 %v1311, %v402
        %1313 = vrot.lane.b32.xlu0 %v1312, 11
        %v1314 = vpop.permute.xlu0 %1313
        %s1315 = scalar_lea.vmem %s5, 72
        %v1316 = vld [vmem:[%s1315] sm:$0xff]
        %1317 = vrot.lane.b32.xlu0 %v1312, 10
        %v1318 = vpop.permute.xlu0 %1317
        %s1319 = scalar_lea.vmem %s5, 80
        %v1320 = vld [vmem:[%s1319] sm:$0xff]
        %v1322 = vsel %vm497, %v1320, 0
        %v1325 = vsel %vm321, %v1318, 0
        %1327 = vmatprep.subr.mxu0 0.0
        %1328 = vmatpush1.msra.mxu0 %v1325
        %1329 = vmatprep.subr.mxu0 0.0
        %1330 = vmatpush1.msra.mxu0 0.0
        %1331 = vmatprep.subr.mxu0 0.0
        %1332 = vmatpush1.msra.mxu0 0.0
        %1333 = vmatprep.subr.mxu0 0.0
        %1334 = vmatpush1.msra.mxu0 0.0
        %1335 = vmatprep.subr.mxu0 0.0
        %1336 = vmatpush1.msra.mxu0 0.0
        %1337 = vmatprep.subr.mxu0 0.0
        %1338 = vmatpush1.msra.mxu0 0.0
        %1339 = vmatprep.subr.mxu0 0.0
        %1340 = vmatpush1.msra.mxu0 0.0
        %1341 = vmatprep.subr.mxu0 0.0
        %1342 = vmatpush1.msra.mxu0 0.0
        %1343 = vmatprep.subr.mxu0 0.0
        %1344 = vmatpush1.msra.mxu0 0.0
        %1345 = vmatprep.subr.mxu0 0.0
        %1346 = vmatpush1.msra.mxu0 0.0
        %1347 = vmatprep.subr.mxu0 0.0
        %1348 = vmatpush1.msra.mxu0 0.0
        %1349 = vmatprep.subr.mxu0 0.0
        %1350 = vmatpush1.msra.mxu0 0.0
        %1351 = vmatprep.subr.mxu0 0.0
        %1352 = vmatpush1.msra.mxu0 0.0
        %1353 = vmatprep.subr.mxu0 0.0
        %1354 = vmatpush1.msra.mxu0 0.0
        %1355 = vmatprep.subr.mxu0 0.0
        %1356 = vmatpush1.msra.mxu0 0.0
        %1357 = vmatprep.subr.mxu0 0.0
        %1358 = vmatpush1.msra.mxu0 0.0
        %1359 = vmatprep.subr.mxu0 0.0
        %1360 = vmatpush1.msra.mxu0 0.0
        %1361 = vmatprep.subr.mxu0 0.0
        %1362 = vmatpush1.msra.mxu0 0.0
        %1363 = vmatprep.subr.mxu0 0.0
        %1364 = vmatpush1.msra.mxu0 0.0
        %1365 = vmatprep.subr.mxu0 0.0
        %1366 = vmatpush1.msra.mxu0 0.0
        %1367 = vmatprep.subr.mxu0 0.0
        %1368 = vmatpush1.msra.mxu0 0.0
        %1369 = vmatprep.subr.mxu0 0.0
        %1370 = vmatpush1.msra.mxu0 0.0
        %1371 = vmatprep.subr.mxu0 0.0
        %1372 = vmatpush1.msra.mxu0 0.0
        %1373 = vmatprep.subr.mxu0 0.0
        %1374 = vmatpush1.msra.mxu0 0.0
        %1375 = vmatprep.subr.mxu0 0.0
        %1376 = vmatpush1.msra.mxu0 0.0
        %1377 = vmatprep.subr.mxu0 0.0
        %1378 = vmatpush1.msra.mxu0 0.0
        %1379 = vmatprep.subr.mxu0 0.0
        %1380 = vmatpush1.msra.mxu0 0.0
        %1381 = vmatprep.subr.mxu0 0.0
        %1382 = vmatpush1.msra.mxu0 0.0
        %1383 = vmatprep.subr.mxu0 0.0
        %1384 = vmatpush1.msra.mxu0 0.0
        %1385 = vmatprep.subr.mxu0 0.0
        %1386 = vmatpush1.msra.mxu0 0.0
        %1387 = vmatprep.subr.mxu0 0.0
        %1388 = vmatpush1.msra.mxu0 0.0
        %1389 = vmatprep.subr.mxu0 0.0
        %1390 = vmatpush1.msra.mxu0 0.0
        %1391 = vmatprep.mubr.f32.mxu0 0.0
        %1392 = vmatmul.mubr.f32.gmra.mrb[0].mxu0 %v1322
        %v1393 = vpop.f32.mrb[0].mxu0
        %v1394 = vadd.f32 0.0, %v1393
        %v1395 = vpop.f32.mrb[0].mxu0
        %1396 = vdwg.mxu0
        %v1398 = vsel %vm497, %v1316, 0
        %v1401 = vsel %vm321, %v1314, 0
        %1403 = vmatprep.subr.mxu0 0.0
        %1404 = vmatpush1.msra.mxu0 %v1401
        %1405 = vmatprep.subr.mxu0 0.0
        %1406 = vmatpush1.msra.mxu0 0.0
        %1407 = vmatprep.subr.mxu0 0.0
        %1408 = vmatpush1.msra.mxu0 0.0
        %1409 = vmatprep.subr.mxu0 0.0
        %1410 = vmatpush1.msra.mxu0 0.0
        %1411 = vmatprep.subr.mxu0 0.0
        %1412 = vmatpush1.msra.mxu0 0.0
        %1413 = vmatprep.subr.mxu0 0.0
        %1414 = vmatpush1.msra.mxu0 0.0
        %1415 = vmatprep.subr.mxu0 0.0
        %1416 = vmatpush1.msra.mxu0 0.0
        %1417 = vmatprep.subr.mxu0 0.0
        %1418 = vmatpush1.msra.mxu0 0.0
        %1419 = vmatprep.subr.mxu0 0.0
        %1420 = vmatpush1.msra.mxu0 0.0
        %1421 = vmatprep.subr.mxu0 0.0
        %1422 = vmatpush1.msra.mxu0 0.0
        %1423 = vmatprep.subr.mxu0 0.0
        %1424 = vmatpush1.msra.mxu0 0.0
        %1425 = vmatprep.subr.mxu0 0.0
        %1426 = vmatpush1.msra.mxu0 0.0
        %1427 = vmatprep.subr.mxu0 0.0
        %1428 = vmatpush1.msra.mxu0 0.0
        %1429 = vmatprep.subr.mxu0 0.0
        %1430 = vmatpush1.msra.mxu0 0.0
        %1431 = vmatprep.subr.mxu0 0.0
        %1432 = vmatpush1.msra.mxu0 0.0
        %1433 = vmatprep.subr.mxu0 0.0
        %1434 = vmatpush1.msra.mxu0 0.0
        %1435 = vmatprep.subr.mxu0 0.0
        %1436 = vmatpush1.msra.mxu0 0.0
        %1437 = vmatprep.subr.mxu0 0.0
        %1438 = vmatpush1.msra.mxu0 0.0
        %1439 = vmatprep.subr.mxu0 0.0
        %1440 = vmatpush1.msra.mxu0 0.0
        %1441 = vmatprep.subr.mxu0 0.0
        %1442 = vmatpush1.msra.mxu0 0.0
        %1443 = vmatprep.subr.mxu0 0.0
        %1444 = vmatpush1.msra.mxu0 0.0
        %1445 = vmatprep.subr.mxu0 0.0
        %1446 = vmatpush1.msra.mxu0 0.0
        %1447 = vmatprep.subr.mxu0 0.0
        %1448 = vmatpush1.msra.mxu0 0.0
        %1449 = vmatprep.subr.mxu0 0.0
        %1450 = vmatpush1.msra.mxu0 0.0
        %1451 = vmatprep.subr.mxu0 0.0
        %1452 = vmatpush1.msra.mxu0 0.0
        %1453 = vmatprep.subr.mxu0 0.0
        %1454 = vmatpush1.msra.mxu0 0.0
        %1455 = vmatprep.subr.mxu0 0.0
        %1456 = vmatpush1.msra.mxu0 0.0
        %1457 = vmatprep.subr.mxu0 0.0
        %1458 = vmatpush1.msra.mxu0 0.0
        %1459 = vmatprep.subr.mxu0 0.0
        %1460 = vmatpush1.msra.mxu0 0.0
        %1461 = vmatprep.subr.mxu0 0.0
        %1462 = vmatpush1.msra.mxu0 0.0
        %1463 = vmatprep.subr.mxu0 0.0
        %1464 = vmatpush1.msra.mxu0 0.0
        %1465 = vmatprep.subr.mxu0 0.0
        %1466 = vmatpush1.msra.mxu0 0.0
        %1467 = vmatprep.mubr.f32.mxu0 0.0
        %1468 = vmatmul.mubr.f32.gmra.mrb[0].mxu0 %v1398
        %v1469 = vpop.f32.mrb[0].mxu0
        %v1470 = vadd.f32 %v1394, %v1469
        %v1471 = vpop.f32.mrb[0].mxu0
        %1472 = vdwg.mxu0
        %1473 = vrot.lane.b32.xlu0 %v1312, 9
        %v1474 = vpop.permute.xlu0 %1473
        %s1475 = scalar_lea.vmem %s5, 88
        %v1476 = vld [vmem:[%s1475] sm:$0xff]
        %v1478 = vsel %vm497, %v1476, 0
        %v1481 = vsel %vm321, %v1474, 0
        %1483 = vmatprep.subr.mxu0 0.0
        %1484 = vmatpush1.msra.mxu0 %v1481
        %1485 = vmatprep.subr.mxu0 0.0
        %1486 = vmatpush1.msra.mxu0 0.0
        %1487 = vmatprep.subr.mxu0 0.0
        %1488 = vmatpush1.msra.mxu0 0.0
        %1489 = vmatprep.subr.mxu0 0.0
        %1490 = vmatpush1.msra.mxu0 0.0
        %1491 = vmatprep.subr.mxu0 0.0
        %1492 = vmatpush1.msra.mxu0 0.0
        %1493 = vmatprep.subr.mxu0 0.0
        %1494 = vmatpush1.msra.mxu0 0.0
        %1495 = vmatprep.subr.mxu0 0.0
        %1496 = vmatpush1.msra.mxu0 0.0
        %1497 = vmatprep.subr.mxu0 0.0
        %1498 = vmatpush1.msra.mxu0 0.0
        %1499 = vmatprep.subr.mxu0 0.0
        %1500 = vmatpush1.msra.mxu0 0.0
        %1501 = vmatprep.subr.mxu0 0.0
        %1502 = vmatpush1.msra.mxu0 0.0
        %1503 = vmatprep.subr.mxu0 0.0
        %1504 = vmatpush1.msra.mxu0 0.0
        %1505 = vmatprep.subr.mxu0 0.0
        %1506 = vmatpush1.msra.mxu0 0.0
        %1507 = vmatprep.subr.mxu0 0.0
        %1508 = vmatpush1.msra.mxu0 0.0
        %1509 = vmatprep.subr.mxu0 0.0
        %1510 = vmatpush1.msra.mxu0 0.0
        %1511 = vmatprep.subr.mxu0 0.0
        %1512 = vmatpush1.msra.mxu0 0.0
        %1513 = vmatprep.subr.mxu0 0.0
        %1514 = vmatpush1.msra.mxu0 0.0
        %1515 = vmatprep.subr.mxu0 0.0
        %1516 = vmatpush1.msra.mxu0 0.0
        %1517 = vmatprep.subr.mxu0 0.0
        %1518 = vmatpush1.msra.mxu0 0.0
        %1519 = vmatprep.subr.mxu0 0.0
        %1520 = vmatpush1.msra.mxu0 0.0
        %1521 = vmatprep.subr.mxu0 0.0
        %1522 = vmatpush1.msra.mxu0 0.0
        %1523 = vmatprep.subr.mxu0 0.0
        %1524 = vmatpush1.msra.mxu0 0.0
        %1525 = vmatprep.subr.mxu0 0.0
        %1526 = vmatpush1.msra.mxu0 0.0
        %1527 = vmatprep.subr.mxu0 0.0
        %1528 = vmatpush1.msra.mxu0 0.0
        %1529 = vmatprep.subr.mxu0 0.0
        %1530 = vmatpush1.msra.mxu0 0.0
        %1531 = vmatprep.subr.mxu0 0.0
        %1532 = vmatpush1.msra.mxu0 0.0
        %1533 = vmatprep.subr.mxu0 0.0
        %1534 = vmatpush1.msra.mxu0 0.0
        %1535 = vmatprep.subr.mxu0 0.0
        %1536 = vmatpush1.msra.mxu0 0.0
        %1537 = vmatprep.subr.mxu0 0.0
        %1538 = vmatpush1.msra.mxu0 0.0
        %1539 = vmatprep.subr.mxu0 0.0
        %1540 = vmatpush1.msra.mxu0 0.0
        %1541 = vmatprep.subr.mxu0 0.0
        %1542 = vmatpush1.msra.mxu0 0.0
        %1543 = vmatprep.subr.mxu0 0.0
        %1544 = vmatpush1.msra.mxu0 0.0
        %1545 = vmatprep.subr.mxu0 0.0
        %1546 = vmatpush1.msra.mxu0 0.0
        %1547 = vmatprep.mubr.f32.mxu0 0.0
        %1548 = vmatmul.mubr.f32.gmra.mrb[0].mxu0 %v1478
        %v1549 = vpop.f32.mrb[0].mxu0
        %v1550 = vadd.f32 0.0, %v1549
        %v1551 = vpop.f32.mrb[0].mxu0
        %1552 = vdwg.mxu0
        %v1553 = vadd.f32 %v1470, %v1550
        %1554 = vrot.lane.b32.xlu0 %v1312, 1
        %v1555 = vpop.permute.xlu0 %1554
        %s1556 = scalar_lea.vmem %s5, 96
        %v1557 = vld [vmem:[%s1556] sm:$0xff]
        %v1559 = vsel %vm497, %v1557, 0
        %v1562 = vsel %vm321, %v1555, 0
        %1564 = vmatprep.subr.mxu0 0.0
        %1565 = vmatpush1.msra.mxu0 %v1562
        %1566 = vmatprep.subr.mxu0 0.0
        %1567 = vmatpush1.msra.mxu0 0.0
        %1568 = vmatprep.subr.mxu0 0.0
        %1569 = vmatpush1.msra.mxu0 0.0
        %1570 = vmatprep.subr.mxu0 0.0
        %1571 = vmatpush1.msra.mxu0 0.0
        %1572 = vmatprep.subr.mxu0 0.0
        %1573 = vmatpush1.msra.mxu0 0.0
        %1574 = vmatprep.subr.mxu0 0.0
        %1575 = vmatpush1.msra.mxu0 0.0
        %1576 = vmatprep.subr.mxu0 0.0
        %1577 = vmatpush1.msra.mxu0 0.0
        %1578 = vmatprep.subr.mxu0 0.0
        %1579 = vmatpush1.msra.mxu0 0.0
        %1580 = vmatprep.subr.mxu0 0.0
        %1581 = vmatpush1.msra.mxu0 0.0
        %1582 = vmatprep.subr.mxu0 0.0
        %1583 = vmatpush1.msra.mxu0 0.0
        %1584 = vmatprep.subr.mxu0 0.0
        %1585 = vmatpush1.msra.mxu0 0.0
        %1586 = vmatprep.subr.mxu0 0.0
        %1587 = vmatpush1.msra.mxu0 0.0
        %1588 = vmatprep.subr.mxu0 0.0
        %1589 = vmatpush1.msra.mxu0 0.0
        %1590 = vmatprep.subr.mxu0 0.0
        %1591 = vmatpush1.msra.mxu0 0.0
        %1592 = vmatprep.subr.mxu0 0.0
        %1593 = vmatpush1.msra.mxu0 0.0
        %1594 = vmatprep.subr.mxu0 0.0
        %1595 = vmatpush1.msra.mxu0 0.0
        %1596 = vmatprep.subr.mxu0 0.0
        %1597 = vmatpush1.msra.mxu0 0.0
        %1598 = vmatprep.subr.mxu0 0.0
        %1599 = vmatpush1.msra.mxu0 0.0
        %1600 = vmatprep.subr.mxu0 0.0
        %1601 = vmatpush1.msra.mxu0 0.0
        %1602 = vmatprep.subr.mxu0 0.0
        %1603 = vmatpush1.msra.mxu0 0.0
        %1604 = vmatprep.subr.mxu0 0.0
        %1605 = vmatpush1.msra.mxu0 0.0
        %1606 = vmatprep.subr.mxu0 0.0
        %1607 = vmatpush1.msra.mxu0 0.0
        %1608 = vmatprep.subr.mxu0 0.0
        %1609 = vmatpush1.msra.mxu0 0.0
        %1610 = vmatprep.subr.mxu0 0.0
        %1611 = vmatpush1.msra.mxu0 0.0
        %1612 = vmatprep.subr.mxu0 0.0
        %1613 = vmatpush1.msra.mxu0 0.0
        %1614 = vmatprep.subr.mxu0 0.0
        %1615 = vmatpush1.msra.mxu0 0.0
        %1616 = vmatprep.subr.mxu0 0.0
        %1617 = vmatpush1.msra.mxu0 0.0
        %1618 = vmatprep.subr.mxu0 0.0
        %1619 = vmatpush1.msra.mxu0 0.0
        %1620 = vmatprep.subr.mxu0 0.0
        %1621 = vmatpush1.msra.mxu0 0.0
        %1622 = vmatprep.subr.mxu0 0.0
        %1623 = vmatpush1.msra.mxu0 0.0
        %1624 = vmatprep.subr.mxu0 0.0
        %1625 = vmatpush1.msra.mxu0 0.0
        %1626 = vmatprep.subr.mxu0 0.0
        %1627 = vmatpush1.msra.mxu0 0.0
        %1628 = vmatprep.mubr.f32.mxu0 0.0
        %1629 = vmatmul.mubr.f32.gmra.mrb[0].mxu0 %v1559
        %v1630 = vpop.f32.mrb[0].mxu0
        %v1631 = vadd.f32 0.0, %v1630
        %v1632 = vpop.f32.mrb[0].mxu0
        %1633 = vdwg.mxu0
        %v1634 = vadd.f32 %v1553, %v1631
        %s1635 = scalar_lea.vmem %s5, 104
        %v1636 = vld [vmem:[%s1635] sm:$0xff]
        %v1638 = vsel %vm497, %v1636, 0
        %v1641 = vsel %vm321, %v1312, 0
        %1643 = vmatprep.subr.mxu0 0.0
        %1644 = vmatpush1.msra.mxu0 %v1641
        %1645 = vmatprep.subr.mxu0 0.0
        %1646 = vmatpush1.msra.mxu0 0.0
        %1647 = vmatprep.subr.mxu0 0.0
        %1648 = vmatpush1.msra.mxu0 0.0
        %1649 = vmatprep.subr.mxu0 0.0
        %1650 = vmatpush1.msra.mxu0 0.0
        %1651 = vmatprep.subr.mxu0 0.0
        %1652 = vmatpush1.msra.mxu0 0.0
        %1653 = vmatprep.subr.mxu0 0.0
        %1654 = vmatpush1.msra.mxu0 0.0
        %1655 = vmatprep.subr.mxu0 0.0
        %1656 = vmatpush1.msra.mxu0 0.0
        %1657 = vmatprep.subr.mxu0 0.0
        %1658 = vmatpush1.msra.mxu0 0.0
        %1659 = vmatprep.subr.mxu0 0.0
        %1660 = vmatpush1.msra.mxu0 0.0
        %1661 = vmatprep.subr.mxu0 0.0
        %1662 = vmatpush1.msra.mxu0 0.0
        %1663 = vmatprep.subr.mxu0 0.0
        %1664 = vmatpush1.msra.mxu0 0.0
        %1665 = vmatprep.subr.mxu0 0.0
        %1666 = vmatpush1.msra.mxu0 0.0
        %1667 = vmatprep.subr.mxu0 0.0
        %1668 = vmatpush1.msra.mxu0 0.0
        %1669 = vmatprep.subr.mxu0 0.0
        %1670 = vmatpush1.msra.mxu0 0.0
        %1671 = vmatprep.subr.mxu0 0.0
        %1672 = vmatpush1.msra.mxu0 0.0
        %1673 = vmatprep.subr.mxu0 0.0
        %1674 = vmatpush1.msra.mxu0 0.0
        %1675 = vmatprep.subr.mxu0 0.0
        %1676 = vmatpush1.msra.mxu0 0.0
        %1677 = vmatprep.subr.mxu0 0.0
        %1678 = vmatpush1.msra.mxu0 0.0
        %1679 = vmatprep.subr.mxu0 0.0
        %1680 = vmatpush1.msra.mxu0 0.0
        %1681 = vmatprep.subr.mxu0 0.0
        %1682 = vmatpush1.msra.mxu0 0.0
        %1683 = vmatprep.subr.mxu0 0.0
        %1684 = vmatpush1.msra.mxu0 0.0
        %1685 = vmatprep.subr.mxu0 0.0
        %1686 = vmatpush1.msra.mxu0 0.0
        %1687 = vmatprep.subr.mxu0 0.0
        %1688 = vmatpush1.msra.mxu0 0.0
        %1689 = vmatprep.subr.mxu0 0.0
        %1690 = vmatpush1.msra.mxu0 0.0
        %1691 = vmatprep.subr.mxu0 0.0
        %1692 = vmatpush1.msra.mxu0 0.0
        %1693 = vmatprep.subr.mxu0 0.0
        %1694 = vmatpush1.msra.mxu0 0.0
        %1695 = vmatprep.subr.mxu0 0.0
        %1696 = vmatpush1.msra.mxu0 0.0
        %1697 = vmatprep.subr.mxu0 0.0
        %1698 = vmatpush1.msra.mxu0 0.0
        %1699 = vmatprep.subr.mxu0 0.0
        %1700 = vmatpush1.msra.mxu0 0.0
        %1701 = vmatprep.subr.mxu0 0.0
        %1702 = vmatpush1.msra.mxu0 0.0
        %1703 = vmatprep.subr.mxu0 0.0
        %1704 = vmatpush1.msra.mxu0 0.0
        %1705 = vmatprep.subr.mxu0 0.0
        %1706 = vmatpush1.msra.mxu0 0.0
        %1707 = vmatprep.mubr.f32.mxu0 0.0
        %1708 = vmatmul.mubr.f32.gmra.mrb[0].mxu0 %v1638
        %v1709 = vpop.f32.mrb[0].mxu0
        %v1710 = vadd.f32 0.0, %v1709
        %v1711 = vpop.f32.mrb[0].mxu0
        %1712 = vdwg.mxu0
        %v1713 = vadd.f32 %v1634, %v1710
        %1714 = vrot.lane.b32.xlu0 %v1312, 127
        %v1715 = vpop.permute.xlu0 %1714
        %s1716 = scalar_lea.vmem %s5, 112
        %v1717 = vld [vmem:[%s1716] sm:$0xff]
        %v1719 = vsel %vm497, %v1717, 0
        %v1722 = vsel %vm321, %v1715, 0
        %1724 = vmatprep.subr.mxu0 0.0
        %1725 = vmatpush1.msra.mxu0 %v1722
        %1726 = vmatprep.subr.mxu0 0.0
        %1727 = vmatpush1.msra.mxu0 0.0
        %1728 = vmatprep.subr.mxu0 0.0
        %1729 = vmatpush1.msra.mxu0 0.0
        %1730 = vmatprep.subr.mxu0 0.0
        %1731 = vmatpush1.msra.mxu0 0.0
        %1732 = vmatprep.subr.mxu0 0.0
        %1733 = vmatpush1.msra.mxu0 0.0
        %1734 = vmatprep.subr.mxu0 0.0
        %1735 = vmatpush1.msra.mxu0 0.0
        %1736 = vmatprep.subr.mxu0 0.0
        %1737 = vmatpush1.msra.mxu0 0.0
        %1738 = vmatprep.subr.mxu0 0.0
        %1739 = vmatpush1.msra.mxu0 0.0
        %1740 = vmatprep.subr.mxu0 0.0
        %1741 = vmatpush1.msra.mxu0 0.0
        %1742 = vmatprep.subr.mxu0 0.0
        %1743 = vmatpush1.msra.mxu0 0.0
        %1744 = vmatprep.subr.mxu0 0.0
        %1745 = vmatpush1.msra.mxu0 0.0
        %1746 = vmatprep.subr.mxu0 0.0
        %1747 = vmatpush1.msra.mxu0 0.0
        %1748 = vmatprep.subr.mxu0 0.0
        %1749 = vmatpush1.msra.mxu0 0.0
        %1750 = vmatprep.subr.mxu0 0.0
        %1751 = vmatpush1.msra.mxu0 0.0
        %1752 = vmatprep.subr.mxu0 0.0
        %1753 = vmatpush1.msra.mxu0 0.0
        %1754 = vmatprep.subr.mxu0 0.0
        %1755 = vmatpush1.msra.mxu0 0.0
        %1756 = vmatprep.subr.mxu0 0.0
        %1757 = vmatpush1.msra.mxu0 0.0
        %1758 = vmatprep.subr.mxu0 0.0
        %1759 = vmatpush1.msra.mxu0 0.0
        %1760 = vmatprep.subr.mxu0 0.0
        %1761 = vmatpush1.msra.mxu0 0.0
        %1762 = vmatprep.subr.mxu0 0.0
        %1763 = vmatpush1.msra.mxu0 0.0
        %1764 = vmatprep.subr.mxu0 0.0
        %1765 = vmatpush1.msra.mxu0 0.0
        %1766 = vmatprep.subr.mxu0 0.0
        %1767 = vmatpush1.msra.mxu0 0.0
        %1768 = vmatprep.subr.mxu0 0.0
        %1769 = vmatpush1.msra.mxu0 0.0
        %1770 = vmatprep.subr.mxu0 0.0
        %1771 = vmatpush1.msra.mxu0 0.0
        %1772 = vmatprep.subr.mxu0 0.0
        %1773 = vmatpush1.msra.mxu0 0.0
        %1774 = vmatprep.subr.mxu0 0.0
        %1775 = vmatpush1.msra.mxu0 0.0
        %1776 = vmatprep.subr.mxu0 0.0
        %1777 = vmatpush1.msra.mxu0 0.0
        %1778 = vmatprep.subr.mxu0 0.0
        %1779 = vmatpush1.msra.mxu0 0.0
        %1780 = vmatprep.subr.mxu0 0.0
        %1781 = vmatpush1.msra.mxu0 0.0
        %1782 = vmatprep.subr.mxu0 0.0
        %1783 = vmatpush1.msra.mxu0 0.0
        %1784 = vmatprep.subr.mxu0 0.0
        %1785 = vmatpush1.msra.mxu0 0.0
        %1786 = vmatprep.subr.mxu0 0.0
        %1787 = vmatpush1.msra.mxu0 0.0
        %1788 = vmatprep.mubr.f32.mxu0 0.0
        %1789 = vmatmul.mubr.f32.gmra.mrb[0].mxu0 %v1719
        %v1790 = vpop.f32.mrb[0].mxu0
        %v1791 = vadd.f32 0.0, %v1790
        %v1792 = vpop.f32.mrb[0].mxu0
        %1793 = vdwg.mxu0
        %v1794 = vadd.f32 %v1713, %v1791
        %1795 = vrot.lane.b32.xlu0 %v1312, 119
        %v1796 = vpop.permute.xlu0 %1795
        %s1797 = scalar_lea.vmem %s5, 120
        %v1798 = vld [vmem:[%s1797] sm:$0xff]
        %v1800 = vsel %vm497, %v1798, 0
        %v1803 = vsel %vm321, %v1796, 0
        %1805 = vmatprep.subr.mxu0 0.0
        %1806 = vmatpush1.msra.mxu0 %v1803
        %1807 = vmatprep.subr.mxu0 0.0
        %1808 = vmatpush1.msra.mxu0 0.0
        %1809 = vmatprep.subr.mxu0 0.0
        %1810 = vmatpush1.msra.mxu0 0.0
        %1811 = vmatprep.subr.mxu0 0.0
        %1812 = vmatpush1.msra.mxu0 0.0
        %1813 = vmatprep.subr.mxu0 0.0
        %1814 = vmatpush1.msra.mxu0 0.0
        %1815 = vmatprep.subr.mxu0 0.0
        %1816 = vmatpush1.msra.mxu0 0.0
        %1817 = vmatprep.subr.mxu0 0.0
        %1818 = vmatpush1.msra.mxu0 0.0
        %1819 = vmatprep.subr.mxu0 0.0
        %1820 = vmatpush1.msra.mxu0 0.0
        %1821 = vmatprep.subr.mxu0 0.0
        %1822 = vmatpush1.msra.mxu0 0.0
        %1823 = vmatprep.subr.mxu0 0.0
        %1824 = vmatpush1.msra.mxu0 0.0
        %1825 = vmatprep.subr.mxu0 0.0
        %1826 = vmatpush1.msra.mxu0 0.0
        %1827 = vmatprep.subr.mxu0 0.0
        %1828 = vmatpush1.msra.mxu0 0.0
        %1829 = vmatprep.subr.mxu0 0.0
        %1830 = vmatpush1.msra.mxu0 0.0
        %1831 = vmatprep.subr.mxu0 0.0
        %1832 = vmatpush1.msra.mxu0 0.0
        %1833 = vmatprep.subr.mxu0 0.0
        %1834 = vmatpush1.msra.mxu0 0.0
        %1835 = vmatprep.subr.mxu0 0.0
        %1836 = vmatpush1.msra.mxu0 0.0
        %1837 = vmatprep.subr.mxu0 0.0
        %1838 = vmatpush1.msra.mxu0 0.0
        %1839 = vmatprep.subr.mxu0 0.0
        %1840 = vmatpush1.msra.mxu0 0.0
        %1841 = vmatprep.subr.mxu0 0.0
        %1842 = vmatpush1.msra.mxu0 0.0
        %1843 = vmatprep.subr.mxu0 0.0
        %1844 = vmatpush1.msra.mxu0 0.0
        %1845 = vmatprep.subr.mxu0 0.0
        %1846 = vmatpush1.msra.mxu0 0.0
        %1847 = vmatprep.subr.mxu0 0.0
        %1848 = vmatpush1.msra.mxu0 0.0
        %1849 = vmatprep.subr.mxu0 0.0
        %1850 = vmatpush1.msra.mxu0 0.0
        %1851 = vmatprep.subr.mxu0 0.0
        %1852 = vmatpush1.msra.mxu0 0.0
        %1853 = vmatprep.subr.mxu0 0.0
        %1854 = vmatpush1.msra.mxu0 0.0
        %1855 = vmatprep.subr.mxu0 0.0
        %1856 = vmatpush1.msra.mxu0 0.0
        %1857 = vmatprep.subr.mxu0 0.0
        %1858 = vmatpush1.msra.mxu0 0.0
        %1859 = vmatprep.subr.mxu0 0.0
        %1860 = vmatpush1.msra.mxu0 0.0
        %1861 = vmatprep.subr.mxu0 0.0
        %1862 = vmatpush1.msra.mxu0 0.0
        %1863 = vmatprep.subr.mxu0 0.0
        %1864 = vmatpush1.msra.mxu0 0.0
        %1865 = vmatprep.subr.mxu0 0.0
        %1866 = vmatpush1.msra.mxu0 0.0
        %1867 = vmatprep.subr.mxu0 0.0
        %1868 = vmatpush1.msra.mxu0 0.0
        %1869 = vmatprep.mubr.f32.mxu0 0.0
        %1870 = vmatmul.mubr.f32.gmra.mrb[0].mxu0 %v1800
        %v1871 = vpop.f32.mrb[0].mxu0
        %v1872 = vadd.f32 0.0, %v1871
        %v1873 = vpop.f32.mrb[0].mxu0
        %1874 = vdwg.mxu0
        %v1875 = vadd.f32 %v1794, %v1872
        %1876 = vrot.lane.b32.xlu0 %v1312, 118
        %v1877 = vpop.permute.xlu0 %1876
        %s1878 = scalar_lea.vmem %s5, 128
        %v1879 = vld [vmem:[%s1878] sm:$0xff]
        %v1881 = vsel %vm497, %v1879, 0
        %v1884 = vsel %vm321, %v1877, 0
        %1886 = vmatprep.subr.mxu0 0.0
        %1887 = vmatpush1.msra.mxu0 %v1884
        %1888 = vmatprep.subr.mxu0 0.0
        %1889 = vmatpush1.msra.mxu0 0.0
        %1890 = vmatprep.subr.mxu0 0.0
        %1891 = vmatpush1.msra.mxu0 0.0
        %1892 = vmatprep.subr.mxu0 0.0
        %1893 = vmatpush1.msra.mxu0 0.0
        %1894 = vmatprep.subr.mxu0 0.0
        %1895 = vmatpush1.msra.mxu0 0.0
        %1896 = vmatprep.subr.mxu0 0.0
        %1897 = vmatpush1.msra.mxu0 0.0
        %1898 = vmatprep.subr.mxu0 0.0
        %1899 = vmatpush1.msra.mxu0 0.0
        %1900 = vmatprep.subr.mxu0 0.0
        %1901 = vmatpush1.msra.mxu0 0.0
        %1902 = vmatprep.subr.mxu0 0.0
        %1903 = vmatpush1.msra.mxu0 0.0
        %1904 = vmatprep.subr.mxu0 0.0
        %1905 = vmatpush1.msra.mxu0 0.0
        %1906 = vmatprep.subr.mxu0 0.0
        %1907 = vmatpush1.msra.mxu0 0.0
        %1908 = vmatprep.subr.mxu0 0.0
        %1909 = vmatpush1.msra.mxu0 0.0
        %1910 = vmatprep.subr.mxu0 0.0
        %1911 = vmatpush1.msra.mxu0 0.0
        %1912 = vmatprep.subr.mxu0 0.0
        %1913 = vmatpush1.msra.mxu0 0.0
        %1914 = vmatprep.subr.mxu0 0.0
        %1915 = vmatpush1.msra.mxu0 0.0
        %1916 = vmatprep.subr.mxu0 0.0
        %1917 = vmatpush1.msra.mxu0 0.0
        %1918 = vmatprep.subr.mxu0 0.0
        %1919 = vmatpush1.msra.mxu0 0.0
        %1920 = vmatprep.subr.mxu0 0.0
        %1921 = vmatpush1.msra.mxu0 0.0
        %1922 = vmatprep.subr.mxu0 0.0
        %1923 = vmatpush1.msra.mxu0 0.0
        %1924 = vmatprep.subr.mxu0 0.0
        %1925 = vmatpush1.msra.mxu0 0.0
        %1926 = vmatprep.subr.mxu0 0.0
        %1927 = vmatpush1.msra.mxu0 0.0
        %1928 = vmatprep.subr.mxu0 0.0
        %1929 = vmatpush1.msra.mxu0 0.0
        %1930 = vmatprep.subr.mxu0 0.0
        %1931 = vmatpush1.msra.mxu0 0.0
        %1932 = vmatprep.subr.mxu0 0.0
        %1933 = vmatpush1.msra.mxu0 0.0
        %1934 = vmatprep.subr.mxu0 0.0
        %1935 = vmatpush1.msra.mxu0 0.0
        %1936 = vmatprep.subr.mxu0 0.0
        %1937 = vmatpush1.msra.mxu0 0.0
        %1938 = vmatprep.subr.mxu0 0.0
        %1939 = vmatpush1.msra.mxu0 0.0
        %1940 = vmatprep.subr.mxu0 0.0
        %1941 = vmatpush1.msra.mxu0 0.0
        %1942 = vmatprep.subr.mxu0 0.0
        %1943 = vmatpush1.msra.mxu0 0.0
        %1944 = vmatprep.subr.mxu0 0.0
        %1945 = vmatpush1.msra.mxu0 0.0
        %1946 = vmatprep.subr.mxu0 0.0
        %1947 = vmatpush1.msra.mxu0 0.0
        %1948 = vmatprep.subr.mxu0 0.0
        %1949 = vmatpush1.msra.mxu0 0.0
        %1950 = vmatprep.mubr.f32.mxu0 0.0
        %1951 = vmatmul.mubr.f32.gmra.mrb[0].mxu0 %v1881
        %v1952 = vpop.f32.mrb[0].mxu0
        %v1953 = vadd.f32 0.0, %v1952
        %v1954 = vpop.f32.mrb[0].mxu0
        %1955 = vdwg.mxu0
        %v1956 = vadd.f32 %v1875, %v1953
        %1957 = vrot.lane.b32.xlu0 %v1312, 117
        %v1958 = vpop.permute.xlu0 %1957
        %s1959 = scalar_lea.vmem %s5, 136
        %v1960 = vld [vmem:[%s1959] sm:$0xff]
        %v1962 = vsel %vm497, %v1960, 0
        %v1965 = vsel %vm321, %v1958, 0
        %1967 = vmatprep.subr.mxu0 0.0
        %1968 = vmatpush1.msra.mxu0 %v1965
        %1969 = vmatprep.subr.mxu0 0.0
        %1970 = vmatpush1.msra.mxu0 0.0
        %1971 = vmatprep.subr.mxu0 0.0
        %1972 = vmatpush1.msra.mxu0 0.0
        %1973 = vmatprep.subr.mxu0 0.0
        %1974 = vmatpush1.msra.mxu0 0.0
        %1975 = vmatprep.subr.mxu0 0.0
        %1976 = vmatpush1.msra.mxu0 0.0
        %1977 = vmatprep.subr.mxu0 0.0
        %1978 = vmatpush1.msra.mxu0 0.0
        %1979 = vmatprep.subr.mxu0 0.0
        %1980 = vmatpush1.msra.mxu0 0.0
        %1981 = vmatprep.subr.mxu0 0.0
        %1982 = vmatpush1.msra.mxu0 0.0
        %1983 = vmatprep.subr.mxu0 0.0
        %1984 = vmatpush1.msra.mxu0 0.0
        %1985 = vmatprep.subr.mxu0 0.0
        %1986 = vmatpush1.msra.mxu0 0.0
        %1987 = vmatprep.subr.mxu0 0.0
        %1988 = vmatpush1.msra.mxu0 0.0
        %1989 = vmatprep.subr.mxu0 0.0
        %1990 = vmatpush1.msra.mxu0 0.0
        %1991 = vmatprep.subr.mxu0 0.0
        %1992 = vmatpush1.msra.mxu0 0.0
        %1993 = vmatprep.subr.mxu0 0.0
        %1994 = vmatpush1.msra.mxu0 0.0
        %1995 = vmatprep.subr.mxu0 0.0
        %1996 = vmatpush1.msra.mxu0 0.0
        %1997 = vmatprep.subr.mxu0 0.0
        %1998 = vmatpush1.msra.mxu0 0.0
        %1999 = vmatprep.subr.mxu0 0.0
        %2000 = vmatpush1.msra.mxu0 0.0
        %2001 = vmatprep.subr.mxu0 0.0
        %2002 = vmatpush1.msra.mxu0 0.0
        %2003 = vmatprep.subr.mxu0 0.0
        %2004 = vmatpush1.msra.mxu0 0.0
        %2005 = vmatprep.subr.mxu0 0.0
        %2006 = vmatpush1.msra.mxu0 0.0
        %2007 = vmatprep.subr.mxu0 0.0
        %2008 = vmatpush1.msra.mxu0 0.0
        %2009 = vmatprep.subr.mxu0 0.0
        %2010 = vmatpush1.msra.mxu0 0.0
        %2011 = vmatprep.subr.mxu0 0.0
        %2012 = vmatpush1.msra.mxu0 0.0
        %2013 = vmatprep.subr.mxu0 0.0
        %2014 = vmatpush1.msra.mxu0 0.0
        %2015 = vmatprep.subr.mxu0 0.0
        %2016 = vmatpush1.msra.mxu0 0.0
        %2017 = vmatprep.subr.mxu0 0.0
        %2018 = vmatpush1.msra.mxu0 0.0
        %2019 = vmatprep.subr.mxu0 0.0
        %2020 = vmatpush1.msra.mxu0 0.0
        %2021 = vmatprep.subr.mxu0 0.0
        %2022 = vmatpush1.msra.mxu0 0.0
        %2023 = vmatprep.subr.mxu0 0.0
        %2024 = vmatpush1.msra.mxu0 0.0
        %2025 = vmatprep.subr.mxu0 0.0
        %2026 = vmatpush1.msra.mxu0 0.0
        %2027 = vmatprep.subr.mxu0 0.0
        %2028 = vmatpush1.msra.mxu0 0.0
        %2029 = vmatprep.subr.mxu0 0.0
        %2030 = vmatpush1.msra.mxu0 0.0
        %2031 = vmatprep.mubr.f32.mxu0 0.0
        %2032 = vmatmul.mubr.f32.gmra.mrb[0].mxu0 %v1962
        %v2033 = vpop.f32.mrb[0].mxu0
        %v2034 = vadd.f32 0.0, %v2033
        %v2035 = vpop.f32.mrb[0].mxu0
        %2036 = vdwg.mxu0
        %v2037 = vadd.f32 %v1956, %v2034
        %s2038 = scalar_lea.vmem %s6, 8
        %v2039 = vld [vmem:[%s2038] sm:$0xff]
        %2041 = vset.pattern.permute.xlu0 0
        %2042 = vperm.xlu0 %2041, %v2039
        %v2043 = vpop.permute.xlu0 %2042
        %v2045 = vadd.f32 %v2037, %v2043
        %vm2046 = vcmp.gt.f32.partialorder %v2045, 0.0
        %v2047 = vmul.f32 %v2045, 0.1
        %v2048 = vsel %vm2046, %v2045, %v2047
        %v2049 = vmul.f32 %v2048, %v402
        %v2050 = vadd.f32 %v1226, %v2049
        %2051 = vst [vmem:[%s298] sm:$0xff] %v2050
        %s2052 = sand.u32 %s203, 1
        %s2053 = scalar_lea.sflag [#allocation3], %s2052
        %s2054 = sand.u32 %s203, 1
        %s2055 = smul.addr %s2054, 8
        %s2056 = scalar_lea.vmem [#allocation2], %s2055
        // Predicated region
        $region53: #{tpu_custom_call.1} parent=51 // pred_check
          %p2057 = pneg %p213
        $region54: #{tpu_custom_call.1} parent=51 // pred_check_branch
          %2059 = sbr.rel (%p2057) target = $region56
        $region55: #{tpu_custom_call.1} parent=51 // pred_region
          %s2061 = ssub.s32 128, 128
          %2062 = vsyncadd %s2053, %s2061
          %s2063 = smul.addr %s22, 128
          %s2064 = scalar_lea.hbm %s8, %s2063
          %s2066 = sshll.u32 %s2056, 4
          %s2067 = int_to_ptr.vmem [resolvable:$true] %s2066
          %2069 = dma.vmem_to_hbm [thread:$0]  %s2067, 128, %s2064, %s2053
        $region56: #{tpu_custom_call.1} parent=51 // pred_fallthru
          _
      $region52: #{tpu_custom_call.1} parent=5 // pred_fallthru
        _
      %p2070 = scmp.le.s32.totalorder 2, %s17
      // Predicated region
      $region57: #{tpu_custom_call.1} parent=5 // pred_check
        %p2071 = pneg %p2070
      $region58: #{tpu_custom_call.1} parent=5 // pred_check_branch
        %2073 = sbr.rel (%p2071) target = $region60
      $region59: #{tpu_custom_call.1} parent=5 // pred_region
        %s2074 = ssub.s32 %s17, 2
        // Predicated region
        $region61: #{tpu_custom_call.1} parent=59 // pred_check
          %p2075 = pneg %p219
        $region62: #{tpu_custom_call.1} parent=59 // pred_check_branch
          %2077 = sbr.rel (%p2075) target = $region64
        $region63: #{tpu_custom_call.1} parent=59 // pred_region
          %s2078 = sand.u32 %s204, 1
          %s2079 = scalar_lea.sflag [#allocation3], %s2078
          %s2080 = sand.u32 %s204, 1
          %s2081 = smul.addr %s2080, 8
          %s2082 = scalar_lea.vmem [#allocation2], %s2081
          %2083 = dma.done %s2079, 128
        $region64: #{tpu_custom_call.1} parent=59 // pred_fallthru
          _
      $region60: #{tpu_custom_call.1} parent=5 // pred_fallthru
        _
    $region6: #{tpu_custom_call.1} parent=1 // loop_footer
      %s21 = sadd.s32 1, %s17
    $region7: #{tpu_custom_call.1} parent=1 // loop_footer_branch
      %16 = sbr.rel target = $region3
    $region8: #{tpu_custom_call.1} parent=1 // loop_exit
      _
    %2084 = vsyncpa [#allocation3], 1
    %s2085 = scalar_lea.sflag [#allocation3], 1
    %2086 = vsyncpa %s2085, 1

</llo_original>
